<compile_context>
chip_gen: v7x
topology: tpu7x:2x2x1
jax: 0.10.0
libtpu: 0.0.40
codegen_flags: <defaults>
</compile_context>

<pallas_src>
import numpy as np
import jax
import jax.numpy as jnp
from jax.experimental import pallas as pl

# ----------------------------- configuration -------------------------------
N_HEAD = 4
HIDDEN = 32
HEAD_DIM = HIDDEN // N_HEAD          # 8
INTER = 64
BATCH = 2
LQ = 8
LKV = 16
R = BATCH * LQ                       # 16 flattened query rows
S = BATCH * LKV                      # 32 flattened key rows
EPS = float(jnp.finfo(jnp.float32).eps)   # nn.RMSNorm(eps=None) -> finfo(f32).eps
NEG_INF = -1e30

# Row offsets inside the lane-width-32 constant pack (all multiples of 16 so
# bf16 (16, 128) sublane tiles stay aligned).
_O_WKT = 0                        # (64, 32)  [wk^T ; (wk@R)^T] per head
_O_ROPK = _O_WKT + 2 * HIDDEN     # 64        (64, 32)  [cos_k^T ; sin_k^T] per head
_O_MASK = _O_ROPK + 2 * HIDDEN    # 128       (16, 32)  additive cross-batch mask
_O_WV = _O_MASK + R               # 144       (32, 32)  V weight, heads along cols
_O_WO = _O_WV + HIDDEN            # 176       (32, 32)  out_proj weight (transposed)
_O_W2 = _O_WO + HIDDEN            # 208       (64, 32)  fc2 weight (transposed)
_PK32_ROWS = _O_W2 + INTER        # 272


# ------------------------------ Pallas kernel ------------------------------
def _layer_kernel(x_ref, y_ref, pk64_ref, pk32_ref, w1_ref, o_ref):
    f32, bf16 = jnp.float32, jnp.bfloat16
    nh, hd = N_HEAD, HEAD_DIM

    # ---- unpack constants (static ref slices: zero-cost views) ----
    wq = pk64_ref[0:HIDDEN, :]                            # (32, 64) bf16  [wq|wq@R]/head, ln1 folded
    ropq = pk64_ref[HIDDEN:HIDDEN + R, :].astype(f32)     # (16, 64)       [cos|sin]/head
    wkT = pk32_ref[_O_WKT:_O_WKT + 2 * HIDDEN, :]         # (64, 32) bf16
    ropk = pk32_ref[_O_ROPK:_O_ROPK + 2 * HIDDEN, :].astype(f32)   # (64, 32)
    mask = pk32_ref[_O_MASK:_O_MASK + R, :].astype(f32)   # (16, 32)
    wv = pk32_ref[_O_WV:_O_WV + HIDDEN, :]                # (32, 32) bf16
    woT = pk32_ref[_O_WO:_O_WO + HIDDEN, :]               # (32, 32) bf16
    w2T = pk32_ref[_O_W2:_O_W2 + INTER, :]                # (64, 32) bf16
    w1 = w1_ref[...]                                      # (32, 128) bf16, ln2 folded

    x = x_ref[...]                                        # (16, 32) f32
    y = y_ref[...]                                        # (32, 32) f32

    def rms0(v):                                          # gain folded into the weights
        return v * jax.lax.rsqrt(jnp.mean(v * v, axis=-1, keepdims=True) + EPS)

    # ----------------------- rotary cross-attention ------------------------
    nx_b = rms0(x).astype(bf16)
    y_b = y.astype(bf16)
    yT_b = y.T.astype(bf16)                               # single 32x32 transpose

    q_all = jnp.dot(nx_b, wq, preferred_element_type=f32)     # (16, 64)  [q|q_rot]/head
    kT_all = jnp.dot(wkT, yT_b, preferred_element_type=f32)   # (64, 32)  [k;k_rot]^T/head
    v_all = jnp.dot(y_b, wv, preferred_element_type=f32)      # (32, 32)  heads along lanes

    # RoPE: rotation already folded into the extra weight columns/rows; apply
    # the position-dependent cos/sin and fold the two halves (pure VPU work).
    qw = q_all * ropq                                     # (16, 64)
    kw = kT_all * ropk                                    # (64, 32)

    o_heads = []
    for h in range(nh):                                   # nh = 4, fully unrolled
        q_h = (qw[:, 2 * hd * h:2 * hd * h + hd]
               + qw[:, 2 * hd * h + hd:2 * hd * (h + 1)]).astype(bf16)   # (16, 8)
        k_h = (kw[2 * hd * h:2 * hd * h + hd, :]
               + kw[2 * hd * h + hd:2 * hd * (h + 1), :]).astype(bf16)   # (8, 32)
        # NOTE: the reference forward never applies self.scale (no 1/sqrt(hd)).
        s = jnp.dot(q_h, k_h, preferred_element_type=f32) + mask          # (16, 32)
        s = s - jnp.max(s, axis=-1, keepdims=True)
        e = jnp.exp(s)
        p = e * pl.reciprocal(jnp.sum(e, axis=-1, keepdims=True), approx=True)
        v_h = v_all[:, hd * h:hd * (h + 1)].astype(bf16)                  # (32, 8)
        o_heads.append(jnp.dot(p.astype(bf16), v_h, preferred_element_type=f32))

    o_cat = jnp.concatenate(o_heads, axis=-1).astype(bf16)                # (16, 32)
    x1 = x + jnp.dot(o_cat, woT, preferred_element_type=f32)              # residual 1

    # ------------------------------- SwiGLU --------------------------------
    h12 = jnp.dot(rms0(x1).astype(bf16), w1, preferred_element_type=f32)  # (16, 128)
    a, b = h12[:, :INTER], h12[:, INTER:]
    gated = (a * jax.nn.sigmoid(a) * b).astype(bf16)
    o_ref[...] = x1 + jnp.dot(gated, w2T, preferred_element_type=f32)     # residual 2


# ------------------------------ host helpers -------------------------------
def _sin_cos_table(seq_len, head_dim):
    pos = np.arange(seq_len, dtype=np.float32)[:, None]
    ids = np.arange(head_dim // 2, dtype=np.float32)
    theta = 10000.0 ** (2.0 * ids / head_dim)
    emb = pos / theta                                     # (L, hd/2)
    sin = np.repeat(np.sin(emb), 2, axis=-1)              # [s0,s0,s1,s1,...]
    cos = np.repeat(np.cos(emb), 2, axis=-1)
    return sin, cos


def _rot_matrix(head_dim):
    # rot(q)[2i] = -q[2i+1], rot(q)[2i+1] = q[2i]  =>  rot(q) = q @ R
    r = np.zeros((head_dim, head_dim), dtype=np.float32)
    for i in range(head_dim // 2):
        r[2 * i + 1, 2 * i] = -1.0
        r[2 * i, 2 * i + 1] = 1.0
    return r


def prepare_params(params):
    """One-time host-side prep (hoisted out of the call path): fold RMSNorm
    gains and the RoPE rotation into the weights, pre-transpose K, build
    RoPE/mask tables, and pack everything into three bf16 slabs."""
    nh, hd, H = N_HEAD, HEAD_DIM, HIDDEN
    ln1 = np.asarray(params["ln1"], np.float32)
    ln2 = np.asarray(params["ln2"], np.float32)
    rot = _rot_matrix(hd)

    # Q: fold ln1 gain + RoPE rotation; per-head column blocks [wq | wq@R].
    wq_t = ln1[:, None] * np.asarray(params["wq"], np.float32).T           # (H, H)
    wq_h = wq_t.reshape(H, nh, hd)
    wq_all = np.concatenate([wq_h, np.einsum("chd,de->che", wq_h, rot)],
                            axis=-1).reshape(H, nh * 2 * hd)               # (32, 64)

    # K / V from interleaved kv_proj; K (and K@R) pre-transposed, heads along rows.
    wkv_t = np.asarray(params["wkv"], np.float32).T.reshape(H, nh, 2 * hd)
    wk_h, wv_h = wkv_t[:, :, :hd], wkv_t[:, :, hd:]
    wkT_all = np.concatenate([wk_h, np.einsum("chd,de->che", wk_h, rot)],
                             axis=-1).transpose(1, 2, 0).reshape(nh * 2 * hd, H)  # (64, 32)
    wv_all = wv_h.reshape(H, nh * hd)                                      # (32, 32)

    wo_t = np.asarray(params["wo"], np.float32).T                          # (32, 32)
    w1 = ln2[:, None] * np.asarray(params["wfc1"], np.float32).T           # (32, 128) ln2 folded
    w2_t = np.asarray(params["wfc2"], np.float32).T                        # (64, 32)

    # RoPE tables in the kernel's layouts (batch-flattened rows / cols).
    sin_q, cos_q = _sin_cos_table(LQ, hd)
    sin_k, cos_k = _sin_cos_table(LKV, hd)
    rope_q = np.tile(np.concatenate([np.tile(cos_q, (BATCH, 1)),
                                     np.tile(sin_q, (BATCH, 1))], axis=-1),
                     (1, nh))                                              # (16, 64)
    rope_k = np.tile(np.concatenate([np.tile(cos_k, (BATCH, 1)).T,
                                     np.tile(sin_k, (BATCH, 1)).T], axis=0),
                     (nh, 1))                                              # (64, 32)

    # Additive mask blocking cross-batch attention once batch is flattened.
    rb = np.repeat(np.arange(BATCH), LQ)
    cb = np.repeat(np.arange(BATCH), LKV)
    mask = np.where(rb[:, None] == cb[None, :], 0.0, NEG_INF).astype(np.float32)   # (16, 32)

    pk64 = np.concatenate([wq_all, rope_q], axis=0)                        # (48, 64)
    pk32 = np.concatenate([wkT_all, rope_k, mask, wv_all, wo_t, w2_t], axis=0)
    assert pk32.shape == (_PK32_ROWS, H)

    bf16 = jnp.bfloat16
    return (jnp.asarray(pk64, bf16), jnp.asarray(pk32, bf16), jnp.asarray(w1, bf16))


# ------------------------------ call wrapper --------------------------------
@jax.jit
def rotary_cross_encoder_layer(x, y, pk64, pk32, w1):
    B, Lq, H = x.shape
    Lkv = y.shape[1]
    out2d = pl.pallas_call(
        _layer_kernel,
        out_shape=jax.ShapeDtypeStruct((B * Lq, H), jnp.float32),
    )(x.reshape(B * Lq, H), y.reshape(B * Lkv, H), pk64, pk32, w1)
    return out2d.reshape(B, Lq, H)


# --------------------------- pure-JAX reference ------------------------------
def reference_layer(x, y, p):
    def rms(v, w):
        return v * jax.lax.rsqrt(jnp.mean(v * v, -1, keepdims=True) + EPS) * w

    B, Lq, H = x.shape
    Lkv = y.shape[1]
    nh, hd, inter = N_HEAD, HEAD_DIM, INTER

    nx = rms(x, p["ln1"])
    q = nx @ p["wq"].T
    kv = y @ p["wkv"].T
    q = q.reshape(B, Lq, nh, hd).transpose(0, 2, 1, 3)
    kv = kv.reshape(B, Lkv, nh, 2 * hd).transpose(0, 2, 1, 3)
    k, v = kv[..., :hd], kv[..., hd:]

    sq, cq = _sin_cos_table(Lq, hd)
    sk, ck = _sin_cos_table(Lkv, hd)
    sq, cq, sk, ck = map(jnp.asarray, (sq, cq, sk, ck))

    def rot(t):
        te, to = t[..., 0::2], t[..., 1::2]
        return jnp.stack([-to, te], axis=-1).reshape(t.shape)

    q = q * cq + rot(q) * sq
    k = k * ck + rot(k) * sk

    s = jnp.einsum("bhqd,bhkd->bhqk", q, k)
    pa = jax.nn.softmax(s, axis=-1)
    o = jnp.einsum("bhqk,bhkd->bhqd", pa, v)
    o = o.transpose(0, 2, 1, 3).reshape(B, Lq, H)
    x1 = x + o @ p["wo"].T

    nx2 = rms(x1, p["ln2"])
    h12 = nx2 @ p["wfc1"].T
    a, b = h12[..., :inter], h12[..., inter:]
    mlp = (a * jax.nn.sigmoid(a) * b) @ p["wfc2"].T
    return x1 + mlp


# ----------------------------------- main ------------------------------------
if __name__ == "__main__":
    key = jax.random.PRNGKey(0)
    ks = jax.random.split(key, 10)

    # Deterministic synthetic parameters (PyTorch Linear weight layout: (out, in)).
    params = {
        "wq":   jax.random.normal(ks[0], (HIDDEN, HIDDEN), jnp.float32) * 0.05,
        "wkv":  jax.random.normal(ks[1], (2 * HIDDEN, HIDDEN), jnp.float32) * 0.05,
        "wo":   jax.random.normal(ks[2], (HIDDEN, HIDDEN), jnp.float32) * 0.05,
        "wfc1": jax.random.normal(ks[3], (2 * INTER, HIDDEN), jnp.float32) * 0.05,
        "wfc2": jax.random.normal(ks[4], (HIDDEN, INTER), jnp.float32) * 0.05,
        "ln1":  1.0 + 0.1 * jax.random.normal(ks[5], (HIDDEN,), jnp.float32),
        "ln2":  1.0 + 0.1 * jax.random.normal(ks[6], (HIDDEN,), jnp.float32),
    }

    x = jax.random.normal(ks[7], (BATCH, LQ, HIDDEN), jnp.float32)
    norm_y = jax.random.normal(ks[8], (BATCH, LKV, HIDDEN), jnp.float32)

    prepped = prepare_params(params)          # one-time host prep (hoisted)
    out = jax.block_until_ready(rotary_cross_encoder_layer(x, norm_y, *prepped))
    ref = jax.block_until_ready(reference_layer(x, norm_y, params))

    assert out.shape == (BATCH, LQ, HIDDEN)
    # Tolerance sized for bf16 MXU operands + approx softmax reciprocal.
    np.testing.assert_allclose(np.asarray(out), np.asarray(ref),
                               rtol=2e-2, atol=2e-2)
    print("KERNEL_OK")
</pallas_src>

<mosaic_0001>
module attributes {stable_mosaic.version = 11 : i64} {
  func.func @_layer_kernel(%arg0: memref<16x32xf32, #tpu.memory_space<vmem>>, %arg1: memref<32x32xf32, #tpu.memory_space<vmem>>, %arg2: memref<48x64xbf16, #tpu.memory_space<vmem>>, %arg3: memref<272x32xbf16, #tpu.memory_space<vmem>>, %arg4: memref<32x128xbf16, #tpu.memory_space<vmem>>, %arg5: memref<16x32xf32, #tpu.memory_space<vmem>>) attributes {dimension_semantics = [], scalar_prefetch = 0 : i64, scratch_operands = 0 : i64, tpu.core_type = #tpu.core_type<tc>} {
    %c0 = arith.constant 0 : index
    %c0_0 = arith.constant 0 : index
    %0 = vector.load %arg2[%c0, %c0_0] : memref<48x64xbf16, #tpu.memory_space<vmem>>, vector<32x64xbf16>
    %c32 = arith.constant 32 : index
    %c0_1 = arith.constant 0 : index
    %1 = vector.load %arg2[%c32, %c0_1] : memref<48x64xbf16, #tpu.memory_space<vmem>>, vector<16x64xbf16>
    %2 = arith.extf %1 : vector<16x64xbf16> to vector<16x64xf32>
    %c0_2 = arith.constant 0 : index
    %c0_3 = arith.constant 0 : index
    %3 = vector.load %arg3[%c0_2, %c0_3] : memref<272x32xbf16, #tpu.memory_space<vmem>>, vector<64x32xbf16>
    %c64 = arith.constant 64 : index
    %c0_4 = arith.constant 0 : index
    %4 = vector.load %arg3[%c64, %c0_4] : memref<272x32xbf16, #tpu.memory_space<vmem>>, vector<64x32xbf16>
    %5 = arith.extf %4 : vector<64x32xbf16> to vector<64x32xf32>
    %c128 = arith.constant 128 : index
    %c0_5 = arith.constant 0 : index
    %6 = vector.load %arg3[%c128, %c0_5] : memref<272x32xbf16, #tpu.memory_space<vmem>>, vector<16x32xbf16>
    %7 = arith.extf %6 : vector<16x32xbf16> to vector<16x32xf32>
    %c144 = arith.constant 144 : index
    %c0_6 = arith.constant 0 : index
    %8 = vector.load %arg3[%c144, %c0_6] : memref<272x32xbf16, #tpu.memory_space<vmem>>, vector<32x32xbf16>
    %c176 = arith.constant 176 : index
    %c0_7 = arith.constant 0 : index
    %9 = vector.load %arg3[%c176, %c0_7] : memref<272x32xbf16, #tpu.memory_space<vmem>>, vector<32x32xbf16>
    %c208 = arith.constant 208 : index
    %c0_8 = arith.constant 0 : index
    %10 = vector.load %arg3[%c208, %c0_8] : memref<272x32xbf16, #tpu.memory_space<vmem>>, vector<64x32xbf16>
    %c0_9 = arith.constant 0 : index
    %c0_10 = arith.constant 0 : index
    %11 = vector.load %arg4[%c0_9, %c0_10] : memref<32x128xbf16, #tpu.memory_space<vmem>>, vector<32x128xbf16>
    %c0_11 = arith.constant 0 : index
    %c0_12 = arith.constant 0 : index
    %12 = vector.load %arg0[%c0_11, %c0_12] : memref<16x32xf32, #tpu.memory_space<vmem>>, vector<16x32xf32>
    %c0_13 = arith.constant 0 : index
    %c0_14 = arith.constant 0 : index
    %13 = vector.load %arg1[%c0_13, %c0_14] : memref<32x32xf32, #tpu.memory_space<vmem>>, vector<32x32xf32>
    %14 = arith.mulf %12, %12 : vector<16x32xf32>
    %cst = arith.constant dense<0.000000e+00> : vector<16xf32>
    %15 = vector.multi_reduction <add>, %14, %cst [1] : vector<16x32xf32> to vector<16xf32>
    %16 = vector.shape_cast %15 : vector<16xf32> to vector<16x1xf32>
    %cst_15 = arith.constant 3.200000e+01 : f32
    %17 = vector.broadcast %cst_15 : f32 to vector<16x1xf32>
    %18 = arith.divf %16, %17 : vector<16x1xf32>
    %cst_16 = arith.constant 1.1920929E-7 : f32
    %19 = vector.broadcast %cst_16 : f32 to vector<16x1xf32>
    %20 = arith.addf %18, %19 : vector<16x1xf32>
    %21 = math.rsqrt %20 : vector<16x1xf32>
    %22 = vector.broadcast %21 : vector<16x1xf32> to vector<16x32xf32>
    %23 = arith.mulf %12, %22 : vector<16x32xf32>
    %24 = arith.truncf %23 : vector<16x32xf32> to vector<16x32xbf16>
    %25 = arith.truncf %13 : vector<32x32xf32> to vector<32x32xbf16>
    %26 = tpu.transpose %13, [1, 0] : vector<32x32xf32> -> vector<32x32xf32>
    %27 = arith.truncf %26 : vector<32x32xf32> to vector<32x32xbf16>
    %cst_17 = arith.constant dense<0.000000e+00> : vector<16x64xf32>
    %28 = tpu.matmul %24, %0, %cst_17 {dimension_numbers = #tpu.dot_dimension_numbers<[1], [0], [0], [1], [0, 0, 1, 1], [], []>} : vector<16x32xbf16>, vector<32x64xbf16>, vector<16x64xf32> -> vector<16x64xf32>
    %cst_18 = arith.constant dense<0.000000e+00> : vector<64x32xf32>
    %29 = tpu.matmul %3, %27, %cst_18 {dimension_numbers = #tpu.dot_dimension_numbers<[1], [0], [0], [1], [0, 0, 1, 1], [], []>} : vector<64x32xbf16>, vector<32x32xbf16>, vector<64x32xf32> -> vector<64x32xf32>
    %cst_19 = arith.constant dense<0.000000e+00> : vector<32x32xf32>
    %30 = tpu.matmul %25, %8, %cst_19 {dimension_numbers = #tpu.dot_dimension_numbers<[1], [0], [0], [1], [0, 0, 1, 1], [], []>} : vector<32x32xbf16>, vector<32x32xbf16>, vector<32x32xf32> -> vector<32x32xf32>
    %31 = arith.mulf %28, %2 : vector<16x64xf32>
    %32 = arith.mulf %29, %5 : vector<64x32xf32>
    %33 = vector.extract_strided_slice %31 {offsets = [0, 0], sizes = [16, 8], strides = [1, 1]} : vector<16x64xf32> to vector<16x8xf32>
    %34 = vector.extract_strided_slice %31 {offsets = [0, 8], sizes = [16, 8], strides = [1, 1]} : vector<16x64xf32> to vector<16x8xf32>
    %35 = arith.addf %33, %34 : vector<16x8xf32>
    %36 = arith.truncf %35 : vector<16x8xf32> to vector<16x8xbf16>
    %37 = vector.extract_strided_slice %32 {offsets = [0, 0], sizes = [8, 32], strides = [1, 1]} : vector<64x32xf32> to vector<8x32xf32>
    %38 = vector.extract_strided_slice %32 {offsets = [8, 0], sizes = [8, 32], strides = [1, 1]} : vector<64x32xf32> to vector<8x32xf32>
    %39 = arith.addf %37, %38 : vector<8x32xf32>
    %40 = arith.truncf %39 : vector<8x32xf32> to vector<8x32xbf16>
    %cst_20 = arith.constant dense<0.000000e+00> : vector<16x32xf32>
    %41 = tpu.matmul %36, %40, %cst_20 {dimension_numbers = #tpu.dot_dimension_numbers<[1], [0], [0], [1], [0, 0, 1, 1], [], []>} : vector<16x8xbf16>, vector<8x32xbf16>, vector<16x32xf32> -> vector<16x32xf32>
    %42 = arith.addf %41, %7 : vector<16x32xf32>
    %cst_21 = arith.constant dense<0xFF800000> : vector<16xf32>
    %43 = vector.multi_reduction <maximumf>, %42, %cst_21 [1] : vector<16x32xf32> to vector<16xf32>
    %44 = vector.shape_cast %43 : vector<16xf32> to vector<16x1xf32>
    %45 = vector.broadcast %44 : vector<16x1xf32> to vector<16x32xf32>
    %46 = arith.subf %42, %45 : vector<16x32xf32>
    %47 = math.exp %46 : vector<16x32xf32>
    %cst_22 = arith.constant dense<0.000000e+00> : vector<16xf32>
    %48 = vector.multi_reduction <add>, %47, %cst_22 [1] : vector<16x32xf32> to vector<16xf32>
    %49 = vector.shape_cast %48 : vector<16xf32> to vector<16x1xf32>
    %50 = tpu.reciprocal %49 {approx = true} : vector<16x1xf32> -> vector<16x1xf32>
    %51 = vector.broadcast %50 : vector<16x1xf32> to vector<16x32xf32>
    %52 = arith.mulf %47, %51 : vector<16x32xf32>
    %53 = vector.extract_strided_slice %30 {offsets = [0, 0], sizes = [32, 8], strides = [1, 1]} : vector<32x32xf32> to vector<32x8xf32>
    %54 = arith.truncf %53 : vector<32x8xf32> to vector<32x8xbf16>
    %55 = arith.truncf %52 : vector<16x32xf32> to vector<16x32xbf16>
    %cst_23 = arith.constant dense<0.000000e+00> : vector<16x8xf32>
    %56 = tpu.matmul %55, %54, %cst_23 {dimension_numbers = #tpu.dot_dimension_numbers<[1], [0], [0], [1], [0, 0, 1, 1], [], []>} : vector<16x32xbf16>, vector<32x8xbf16>, vector<16x8xf32> -> vector<16x8xf32>
    %57 = vector.extract_strided_slice %31 {offsets = [0, 16], sizes = [16, 8], strides = [1, 1]} : vector<16x64xf32> to vector<16x8xf32>
    %58 = vector.extract_strided_slice %31 {offsets = [0, 24], sizes = [16, 8], strides = [1, 1]} : vector<16x64xf32> to vector<16x8xf32>
    %59 = arith.addf %57, %58 : vector<16x8xf32>
    %60 = arith.truncf %59 : vector<16x8xf32> to vector<16x8xbf16>
    %61 = vector.extract_strided_slice %32 {offsets = [16, 0], sizes = [8, 32], strides = [1, 1]} : vector<64x32xf32> to vector<8x32xf32>
    %62 = vector.extract_strided_slice %32 {offsets = [24, 0], sizes = [8, 32], strides = [1, 1]} : vector<64x32xf32> to vector<8x32xf32>
    %63 = arith.addf %61, %62 : vector<8x32xf32>
    %64 = arith.truncf %63 : vector<8x32xf32> to vector<8x32xbf16>
    %cst_24 = arith.constant dense<0.000000e+00> : vector<16x32xf32>
    %65 = tpu.matmul %60, %64, %cst_24 {dimension_numbers = #tpu.dot_dimension_numbers<[1], [0], [0], [1], [0, 0, 1, 1], [], []>} : vector<16x8xbf16>, vector<8x32xbf16>, vector<16x32xf32> -> vector<16x32xf32>
    %66 = arith.addf %65, %7 : vector<16x32xf32>
    %cst_25 = arith.constant dense<0xFF800000> : vector<16xf32>
    %67 = vector.multi_reduction <maximumf>, %66, %cst_25 [1] : vector<16x32xf32> to vector<16xf32>
    %68 = vector.shape_cast %67 : vector<16xf32> to vector<16x1xf32>
    %69 = vector.broadcast %68 : vector<16x1xf32> to vector<16x32xf32>
    %70 = arith.subf %66, %69 : vector<16x32xf32>
    %71 = math.exp %70 : vector<16x32xf32>
    %cst_26 = arith.constant dense<0.000000e+00> : vector<16xf32>
    %72 = vector.multi_reduction <add>, %71, %cst_26 [1] : vector<16x32xf32> to vector<16xf32>
    %73 = vector.shape_cast %72 : vector<16xf32> to vector<16x1xf32>
    %74 = tpu.reciprocal %73 {approx = true} : vector<16x1xf32> -> vector<16x1xf32>
    %75 = vector.broadcast %74 : vector<16x1xf32> to vector<16x32xf32>
    %76 = arith.mulf %71, %75 : vector<16x32xf32>
    %77 = vector.extract_strided_slice %30 {offsets = [0, 8], sizes = [32, 8], strides = [1, 1]} : vector<32x32xf32> to vector<32x8xf32>
    %78 = arith.truncf %77 : vector<32x8xf32> to vector<32x8xbf16>
    %79 = arith.truncf %76 : vector<16x32xf32> to vector<16x32xbf16>
    %cst_27 = arith.constant dense<0.000000e+00> : vector<16x8xf32>
    %80 = tpu.matmul %79, %78, %cst_27 {dimension_numbers = #tpu.dot_dimension_numbers<[1], [0], [0], [1], [0, 0, 1, 1], [], []>} : vector<16x32xbf16>, vector<32x8xbf16>, vector<16x8xf32> -> vector<16x8xf32>
    %81 = vector.extract_strided_slice %31 {offsets = [0, 32], sizes = [16, 8], strides = [1, 1]} : vector<16x64xf32> to vector<16x8xf32>
    %82 = vector.extract_strided_slice %31 {offsets = [0, 40], sizes = [16, 8], strides = [1, 1]} : vector<16x64xf32> to vector<16x8xf32>
    %83 = arith.addf %81, %82 : vector<16x8xf32>
    %84 = arith.truncf %83 : vector<16x8xf32> to vector<16x8xbf16>
    %85 = vector.extract_strided_slice %32 {offsets = [32, 0], sizes = [8, 32], strides = [1, 1]} : vector<64x32xf32> to vector<8x32xf32>
    %86 = vector.extract_strided_slice %32 {offsets = [40, 0], sizes = [8, 32], strides = [1, 1]} : vector<64x32xf32> to vector<8x32xf32>
    %87 = arith.addf %85, %86 : vector<8x32xf32>
    %88 = arith.truncf %87 : vector<8x32xf32> to vector<8x32xbf16>
    %cst_28 = arith.constant dense<0.000000e+00> : vector<16x32xf32>
    %89 = tpu.matmul %84, %88, %cst_28 {dimension_numbers = #tpu.dot_dimension_numbers<[1], [0], [0], [1], [0, 0, 1, 1], [], []>} : vector<16x8xbf16>, vector<8x32xbf16>, vector<16x32xf32> -> vector<16x32xf32>
    %90 = arith.addf %89, %7 : vector<16x32xf32>
    %cst_29 = arith.constant dense<0xFF800000> : vector<16xf32>
    %91 = vector.multi_reduction <maximumf>, %90, %cst_29 [1] : vector<16x32xf32> to vector<16xf32>
    %92 = vector.shape_cast %91 : vector<16xf32> to vector<16x1xf32>
    %93 = vector.broadcast %92 : vector<16x1xf32> to vector<16x32xf32>
    %94 = arith.subf %90, %93 : vector<16x32xf32>
    %95 = math.exp %94 : vector<16x32xf32>
    %cst_30 = arith.constant dense<0.000000e+00> : vector<16xf32>
    %96 = vector.multi_reduction <add>, %95, %cst_30 [1] : vector<16x32xf32> to vector<16xf32>
    %97 = vector.shape_cast %96 : vector<16xf32> to vector<16x1xf32>
    %98 = tpu.reciprocal %97 {approx = true} : vector<16x1xf32> -> vector<16x1xf32>
    %99 = vector.broadcast %98 : vector<16x1xf32> to vector<16x32xf32>
    %100 = arith.mulf %95, %99 : vector<16x32xf32>
    %101 = vector.extract_strided_slice %30 {offsets = [0, 16], sizes = [32, 8], strides = [1, 1]} : vector<32x32xf32> to vector<32x8xf32>
    %102 = arith.truncf %101 : vector<32x8xf32> to vector<32x8xbf16>
    %103 = arith.truncf %100 : vector<16x32xf32> to vector<16x32xbf16>
    %cst_31 = arith.constant dense<0.000000e+00> : vector<16x8xf32>
    %104 = tpu.matmul %103, %102, %cst_31 {dimension_numbers = #tpu.dot_dimension_numbers<[1], [0], [0], [1], [0, 0, 1, 1], [], []>} : vector<16x32xbf16>, vector<32x8xbf16>, vector<16x8xf32> -> vector<16x8xf32>
    %105 = vector.extract_strided_slice %31 {offsets = [0, 48], sizes = [16, 8], strides = [1, 1]} : vector<16x64xf32> to vector<16x8xf32>
    %106 = vector.extract_strided_slice %31 {offsets = [0, 56], sizes = [16, 8], strides = [1, 1]} : vector<16x64xf32> to vector<16x8xf32>
    %107 = arith.addf %105, %106 : vector<16x8xf32>
    %108 = arith.truncf %107 : vector<16x8xf32> to vector<16x8xbf16>
    %109 = vector.extract_strided_slice %32 {offsets = [48, 0], sizes = [8, 32], strides = [1, 1]} : vector<64x32xf32> to vector<8x32xf32>
    %110 = vector.extract_strided_slice %32 {offsets = [56, 0], sizes = [8, 32], strides = [1, 1]} : vector<64x32xf32> to vector<8x32xf32>
    %111 = arith.addf %109, %110 : vector<8x32xf32>
    %112 = arith.truncf %111 : vector<8x32xf32> to vector<8x32xbf16>
    %cst_32 = arith.constant dense<0.000000e+00> : vector<16x32xf32>
    %113 = tpu.matmul %108, %112, %cst_32 {dimension_numbers = #tpu.dot_dimension_numbers<[1], [0], [0], [1], [0, 0, 1, 1], [], []>} : vector<16x8xbf16>, vector<8x32xbf16>, vector<16x32xf32> -> vector<16x32xf32>
    %114 = arith.addf %113, %7 : vector<16x32xf32>
    %cst_33 = arith.constant dense<0xFF800000> : vector<16xf32>
    %115 = vector.multi_reduction <maximumf>, %114, %cst_33 [1] : vector<16x32xf32> to vector<16xf32>
    %116 = vector.shape_cast %115 : vector<16xf32> to vector<16x1xf32>
    %117 = vector.broadcast %116 : vector<16x1xf32> to vector<16x32xf32>
    %118 = arith.subf %114, %117 : vector<16x32xf32>
    %119 = math.exp %118 : vector<16x32xf32>
    %cst_34 = arith.constant dense<0.000000e+00> : vector<16xf32>
    %120 = vector.multi_reduction <add>, %119, %cst_34 [1] : vector<16x32xf32> to vector<16xf32>
    %121 = vector.shape_cast %120 : vector<16xf32> to vector<16x1xf32>
    %122 = tpu.reciprocal %121 {approx = true} : vector<16x1xf32> -> vector<16x1xf32>
    %123 = vector.broadcast %122 : vector<16x1xf32> to vector<16x32xf32>
    %124 = arith.mulf %119, %123 : vector<16x32xf32>
    %125 = vector.extract_strided_slice %30 {offsets = [0, 24], sizes = [32, 8], strides = [1, 1]} : vector<32x32xf32> to vector<32x8xf32>
    %126 = arith.truncf %125 : vector<32x8xf32> to vector<32x8xbf16>
    %127 = arith.truncf %124 : vector<16x32xf32> to vector<16x32xbf16>
    %cst_35 = arith.constant dense<0.000000e+00> : vector<16x8xf32>
    %128 = tpu.matmul %127, %126, %cst_35 {dimension_numbers = #tpu.dot_dimension_numbers<[1], [0], [0], [1], [0, 0, 1, 1], [], []>} : vector<16x32xbf16>, vector<32x8xbf16>, vector<16x8xf32> -> vector<16x8xf32>
    %129 = tpu.concatenate %56, %80, %104, %128 in 1 : vector<16x8xf32>, vector<16x8xf32>, vector<16x8xf32>, vector<16x8xf32> -> vector<16x32xf32>
    %130 = arith.truncf %129 : vector<16x32xf32> to vector<16x32xbf16>
    %cst_36 = arith.constant dense<0.000000e+00> : vector<16x32xf32>
    %131 = tpu.matmul %130, %9, %cst_36 {dimension_numbers = #tpu.dot_dimension_numbers<[1], [0], [0], [1], [0, 0, 1, 1], [], []>} : vector<16x32xbf16>, vector<32x32xbf16>, vector<16x32xf32> -> vector<16x32xf32>
    %132 = arith.addf %12, %131 : vector<16x32xf32>
    %133 = arith.mulf %132, %132 : vector<16x32xf32>
    %cst_37 = arith.constant dense<0.000000e+00> : vector<16xf32>
    %134 = vector.multi_reduction <add>, %133, %cst_37 [1] : vector<16x32xf32> to vector<16xf32>
    %135 = vector.shape_cast %134 : vector<16xf32> to vector<16x1xf32>
    %cst_38 = arith.constant 3.200000e+01 : f32
    %136 = vector.broadcast %cst_38 : f32 to vector<16x1xf32>
    %137 = arith.divf %135, %136 : vector<16x1xf32>
    %cst_39 = arith.constant 1.1920929E-7 : f32
    %138 = vector.broadcast %cst_39 : f32 to vector<16x1xf32>
    %139 = arith.addf %137, %138 : vector<16x1xf32>
    %140 = math.rsqrt %139 : vector<16x1xf32>
    %141 = vector.broadcast %140 : vector<16x1xf32> to vector<16x32xf32>
    %142 = arith.mulf %132, %141 : vector<16x32xf32>
    %143 = arith.truncf %142 : vector<16x32xf32> to vector<16x32xbf16>
    %cst_40 = arith.constant dense<0.000000e+00> : vector<16x128xf32>
    %144 = tpu.matmul %143, %11, %cst_40 {dimension_numbers = #tpu.dot_dimension_numbers<[1], [0], [0], [1], [0, 0, 1, 1], [], []>} : vector<16x32xbf16>, vector<32x128xbf16>, vector<16x128xf32> -> vector<16x128xf32>
    %145 = vector.extract_strided_slice %144 {offsets = [0, 0], sizes = [16, 64], strides = [1, 1]} : vector<16x128xf32> to vector<16x64xf32>
    %146 = vector.extract_strided_slice %144 {offsets = [0, 64], sizes = [16, 64], strides = [1, 1]} : vector<16x128xf32> to vector<16x64xf32>
    %147 = arith.negf %145 : vector<16x64xf32>
    %148 = math.exp %147 : vector<16x64xf32>
    %cst_41 = arith.constant 1.000000e+00 : f32
    %149 = vector.broadcast %cst_41 : f32 to vector<16x64xf32>
    %150 = arith.addf %149, %148 : vector<16x64xf32>
    %151 = arith.divf %149, %150 : vector<16x64xf32>
    %152 = arith.mulf %145, %151 : vector<16x64xf32>
    %153 = arith.mulf %152, %146 : vector<16x64xf32>
    %154 = arith.truncf %153 : vector<16x64xf32> to vector<16x64xbf16>
    %cst_42 = arith.constant dense<0.000000e+00> : vector<16x32xf32>
    %155 = tpu.matmul %154, %10, %cst_42 {dimension_numbers = #tpu.dot_dimension_numbers<[1], [0], [0], [1], [0, 0, 1, 1], [], []>} : vector<16x64xbf16>, vector<64x32xbf16>, vector<16x32xf32> -> vector<16x32xf32>
    %156 = arith.addf %132, %155 : vector<16x32xf32>
    %c0_43 = arith.constant 0 : index
    %c0_44 = arith.constant 0 : index
    %157 = vector.load %arg5[%c0_43, %c0_44] : memref<16x32xf32, #tpu.memory_space<vmem>>, vector<16x32xf32>
    tpu.vector_store %arg5[%c0_43, %c0_44], %156 {strides = array<i32>} : memref<16x32xf32, #tpu.memory_space<vmem>>, vector<16x32xf32>,
    return
  }
}

</mosaic_0001>

<llo_original>
// kernel: rotary_cross_encoder_layer.1
$region0: #{rotary_cross_encoder_layer.1}
  #allocation0 [shape = 'u32[]', space=smem, size = 0x4, offset = 0x4, fixed_abs, tag = 'smem constant byte address 0x4 - core index']
  #allocation1 [shape = 'u32[144,128]{1,0:T(1,128)}', space=vmem, size = 0x12000, scoped, tag = 'internal scratch']
  %s0 = inlined_call_operand.vmem [shape: f32[16,32], index: 0, kind: input, shape index: {}]
  %s1 = inlined_call_operand.vmem [shape: f32[32,32], index: 1, kind: input, shape index: {}]
  %s2 = inlined_call_operand.vmem [shape: bf16[48,64], index: 2, kind: input, shape index: {}]
  %s3 = inlined_call_operand.vmem [shape: bf16[272,32], index: 3, kind: input, shape index: {}]
  %s4 = inlined_call_operand.vmem [shape: bf16[32,128], index: 4, kind: input, shape index: {}]
  %s5 = inlined_call_operand.hbm [shape: f32[16,32], index: 5, kind: output, shape index: {}]
  %s6 = sld [smem:[#allocation0]]
  $region30: #{rotary_cross_encoder_layer.1} parent=0
    _
  %s8 = ssub.s32 1, %s6
  %s9 = scalar_select 0, %s8, %s6
  $region1: #{rotary_cross_encoder_layer.1} parent=0
    #allocation2 [shape = 'u8[8192]{0}', space=vmem, size = 0x2000, scoped, tag = 'output window, operand 0, single buffered']
    #allocation3 [shape = 's32[1]{0}', space=sflag, size = 0x4, scoped, tag = 'scoped memory for rotary_cross_encoder_layer.1']
    %10 = vsyncpa [#allocation3], 0
    // Predicated region
    $region2: #{rotary_cross_encoder_layer.1} parent=1 // pred_check
      _
    $region3: #{rotary_cross_encoder_layer.1} parent=1 // pred_check_branch
      %12 = sbr.rel (0) target = $region5
    $region4: #{rotary_cross_encoder_layer.1} parent=1 // pred_region
      _
    $region5: #{rotary_cross_encoder_layer.1} parent=1 // pred_fallthru
      _
    // Predicated region
    $region6: #{rotary_cross_encoder_layer.1} parent=1 // pred_check
      _
    $region7: #{rotary_cross_encoder_layer.1} parent=1 // pred_check_branch
      %14 = sbr.rel (0) target = $region9
    $region8: #{rotary_cross_encoder_layer.1} parent=1 // pred_region
      _
    $region9: #{rotary_cross_encoder_layer.1} parent=1 // pred_fallthru
      _
    // Predicated region
    $region10: #{rotary_cross_encoder_layer.1} parent=1 // pred_check
      _
    $region11: #{rotary_cross_encoder_layer.1} parent=1 // pred_check_branch
      %16 = sbr.rel (0) target = $region13
    $region12: #{rotary_cross_encoder_layer.1} parent=1 // pred_region
      _
    $region13: #{rotary_cross_encoder_layer.1} parent=1 // pred_fallthru
      _
    // Predicated region
    $region14: #{rotary_cross_encoder_layer.1} parent=1 // pred_check
      _
    $region15: #{rotary_cross_encoder_layer.1} parent=1 // pred_check_branch
      %18 = sbr.rel (0) target = $region17
    $region16: #{rotary_cross_encoder_layer.1} parent=1 // pred_region
      _
    $region17: #{rotary_cross_encoder_layer.1} parent=1 // pred_fallthru
      _
    // Predicated region
    $region18: #{rotary_cross_encoder_layer.1} parent=1 // pred_check
      _
    $region19: #{rotary_cross_encoder_layer.1} parent=1 // pred_check_branch
      %20 = sbr.rel (0) target = $region21
    $region20: #{rotary_cross_encoder_layer.1} parent=1 // pred_region
      _
    $region21: #{rotary_cross_encoder_layer.1} parent=1 // pred_fallthru
      _
    %v22 = vld [vmem:[%s2] sm:$0xf]
    %v23 = vld [vmem:[%s2 + $0x4] sm:$0xf]
    %v24 = vld [vmem:[%s2 + $0x8] sm:$0xf]
    %v25 = vld [vmem:[%s2 + $0xc] sm:$0xf]
    %v26 = vld [vmem:[%s2 + $0x10] sm:$0xf]
    %v27 = vld [vmem:[%s2 + $0x14] sm:$0xf]
    %v28 = vunpack.c.l.bf16 %v26
    %v29 = vunpack.c.l.bf16 %v27
    %v30 = vld [vmem:[%s3] sm:$0xf]
    %v31 = vld [vmem:[%s3 + $0x4] sm:$0xf]
    %v32 = vld [vmem:[%s3 + $0x8] sm:$0xf]
    %v33 = vld [vmem:[%s3 + $0xc] sm:$0xf]
    %v34 = vld [vmem:[%s3 + $0x10] sm:$0xf]
    %v35 = vld [vmem:[%s3 + $0x14] sm:$0xf]
    %v36 = vld [vmem:[%s3 + $0x18] sm:$0xf]
    %v37 = vld [vmem:[%s3 + $0x1c] sm:$0xf]
    %v38 = vld [vmem:[%s3 + $0x20] sm:$0xf]
    %v39 = vld [vmem:[%s3 + $0x24] sm:$0xf]
    %v40 = vld [vmem:[%s3 + $0x28] sm:$0xf]
    %v41 = vld [vmem:[%s3 + $0x2c] sm:$0xf]
    %v42 = vld [vmem:[%s3 + $0x30] sm:$0xf]
    %v43 = vld [vmem:[%s3 + $0x34] sm:$0xf]
    %v44 = vld [vmem:[%s3 + $0x38] sm:$0xf]
    %v45 = vld [vmem:[%s3 + $0x3c] sm:$0xf]
    %v46 = vunpack.c.l.bf16 %v38
    %v47 = vunpack.c.l.bf16 %v39
    %v48 = vunpack.c.l.bf16 %v40
    %v49 = vunpack.c.l.bf16 %v41
    %v50 = vunpack.c.l.bf16 %v42
    %v51 = vunpack.c.l.bf16 %v43
    %v52 = vunpack.c.l.bf16 %v44
    %v53 = vunpack.c.l.bf16 %v45
    %v54 = vld [vmem:[%s3 + $0x40] sm:$0xf]
    %v55 = vld [vmem:[%s3 + $0x44] sm:$0xf]
    %v56 = vunpack.c.l.bf16 %v54
    %v57 = vunpack.c.l.bf16 %v55
    %v58 = vld [vmem:[%s3 + $0x48] sm:$0xf]
    %v59 = vld [vmem:[%s3 + $0x4c] sm:$0xf]
    %v60 = vld [vmem:[%s3 + $0x50] sm:$0xf]
    %v61 = vld [vmem:[%s3 + $0x54] sm:$0xf]
    %v62 = vld [vmem:[%s3 + $0x58] sm:$0xf]
    %v63 = vld [vmem:[%s3 + $0x5c] sm:$0xf]
    %v64 = vld [vmem:[%s3 + $0x60] sm:$0xf]
    %v65 = vld [vmem:[%s3 + $0x64] sm:$0xf]
    %v66 = vld [vmem:[%s3 + $0x68] sm:$0xf]
    %v67 = vld [vmem:[%s3 + $0x6c] sm:$0xf]
    %v68 = vld [vmem:[%s3 + $0x70] sm:$0xf]
    %v69 = vld [vmem:[%s3 + $0x74] sm:$0xf]
    %v70 = vld [vmem:[%s3 + $0x78] sm:$0xf]
    %v71 = vld [vmem:[%s3 + $0x7c] sm:$0xf]
    %v72 = vld [vmem:[%s3 + $0x80] sm:$0xf]
    %v73 = vld [vmem:[%s3 + $0x84] sm:$0xf]
    %v74 = vld [vmem:[%s4] sm:$0xf]
    %v75 = vld [vmem:[%s4 + $0x4] sm:$0xf]
    %v76 = vld [vmem:[%s4 + $0x8] sm:$0xf]
    %v77 = vld [vmem:[%s4 + $0xc] sm:$0xf]
    %v78 = vld [vmem:[%s0] sm:$0xff]
    %v79 = vld [vmem:[%s0 + $0x8] sm:$0xff]
    %v80 = vld [vmem:[%s1] sm:$0xff]
    %v81 = vld [vmem:[%s1 + $0x8] sm:$0xff]
    %v82 = vld [vmem:[%s1 + $0x10] sm:$0xff]
    %v83 = vld [vmem:[%s1 + $0x18] sm:$0xff]
    %v84 = vmul.f32 %v78, %v78
    %v85 = vmul.f32 %v79, %v79
    %vm86 = vcmask 261120
    %v87 = vsel %vm86, %v84, 0.0
    %88 = vadd.xlane.f32.xlu0 %v87
    %v89 = vpop.xlane.xlu0 %88
    %v90 = vsel %vm86, %v85, 0.0
    %91 = vadd.xlane.f32.xlu0 %v90
    %v92 = vpop.xlane.xlu0 %91
    %v93 = vrcp.pop 32.0
    %v94 = vmul.f32 %v89, %v93
    %v95 = vmul.f32 %v92, %v93
    %v96 = vadd.f32 %v94, 1.1920929e-07
    %v97 = vadd.f32 %v95, 1.1920929e-07
    %v98 = vrsqrt.pop %v96
    %v99 = vrsqrt.pop %v97
    %v100 = vmul.f32 %v78, %v98
    %v101 = vmul.f32 %v79, %v99
    %v102 = vpack.c.bf16 %v101, %v100
    %v103 = vpack.c.bf16 %v81, %v80
    %v104 = vpack.c.bf16 %v83, %v82
    %105 = vxpose.xlu0.b32.start [1/16] %v80, 128
    %106 = vxpose.xlu0.b32.cont [2/16] %v81, 128
    %107 = vxpose.xlu0.b32.cont [3/16] %v82, 128
    %108 = vxpose.xlu0.b32.cont [4/16] %v83, 128
    %109 = vxpose.xlu0.b32.cont [5/16] 0.0, 128
    %110 = vxpose.xlu0.b32.cont [6/16] 0.0, 128
    %111 = vxpose.xlu0.b32.cont [7/16] 0.0, 128
    %112 = vxpose.xlu0.b32.cont [8/16] 0.0, 128
    %113 = vxpose.xlu0.b32.cont [9/16] 0.0, 128
    %114 = vxpose.xlu0.b32.cont [10/16] 0.0, 128
    %115 = vxpose.xlu0.b32.cont [11/16] 0.0, 128
    %116 = vxpose.xlu0.b32.cont [12/16] 0.0, 128
    %117 = vxpose.xlu0.b32.cont [13/16] 0.0, 128
    %118 = vxpose.xlu0.b32.cont [14/16] 0.0, 128
    %119 = vxpose.xlu0.b32.cont [15/16] 0.0, 128
    %120 = vxpose.xlu0.b32.end [16/16] 0.0, 128
    %v121 = vpop.trf.xlu0
    %v122 = vpop.trf.xlu0
    %v123 = vpop.trf.xlu0
    %v124 = vpop.trf.xlu0
    %v125 = vpop.trf.xlu0
    %v126 = vpop.trf.xlu0
    %v127 = vpop.trf.xlu0
    %v128 = vpop.trf.xlu0
    %v129 = vpop.trf.xlu0
    %v130 = vpop.trf.xlu0
    %v131 = vpop.trf.xlu0
    %v132 = vpop.trf.xlu0
    %v133 = vpop.trf.xlu0
    %v134 = vpop.trf.xlu0
    %v135 = vpop.trf.xlu0
    %v136 = vpop.trf.xlu0
    %v137 = vpack.c.bf16 %v122, %v121
    %v138 = vpack.c.bf16 %v124, %v123
    %v143 = vunpack.c.l.b16 %v22
    %v144 = vunpack.c.l.b16 %v23
    %v145 = vunpack.c.l.b16 %v24
    %v146 = vunpack.c.l.b16 %v25
    %v147 = vpack.c.b16 %v144, %v143
    %v148 = vpack.c.b16 %v146, %v145
    %v152 = vsel %vm86, %v102, 0
    %154 = vmatprep.subr.bf16.mxu0 0
    %155 = vmatpush1.bf16.msra.mxu0 %v147
    %156 = vmatprep.subr.bf16.mxu0 0
    %157 = vmatpush1.bf16.msra.mxu0 %v148
    %158 = vmatprep.subr.bf16.mxu0 0
    %159 = vmatpush1.bf16.msra.mxu0 0
    %160 = vmatprep.subr.bf16.mxu0 0
    %161 = vmatpush1.bf16.msra.mxu0 0
    %162 = vmatprep.subr.bf16.mxu0 0
    %163 = vmatpush1.bf16.msra.mxu0 0
    %164 = vmatprep.subr.bf16.mxu0 0
    %165 = vmatpush1.bf16.msra.mxu0 0
    %166 = vmatprep.subr.bf16.mxu0 0
    %167 = vmatpush1.bf16.msra.mxu0 0
    %168 = vmatprep.subr.bf16.mxu0 0
    %169 = vmatpush1.bf16.msra.mxu0 0
    %170 = vmatprep.subr.bf16.mxu0 0
    %171 = vmatpush1.bf16.msra.mxu0 0
    %172 = vmatprep.subr.bf16.mxu0 0
    %173 = vmatpush1.bf16.msra.mxu0 0
    %174 = vmatprep.subr.bf16.mxu0 0
    %175 = vmatpush1.bf16.msra.mxu0 0
    %176 = vmatprep.subr.bf16.mxu0 0
    %177 = vmatpush1.bf16.msra.mxu0 0
    %178 = vmatprep.subr.bf16.mxu0 0
    %179 = vmatpush1.bf16.msra.mxu0 0
    %180 = vmatprep.subr.bf16.mxu0 0
    %181 = vmatpush1.bf16.msra.mxu0 0
    %182 = vmatprep.subr.bf16.mxu0 0
    %183 = vmatpush1.bf16.msra.mxu0 0
    %184 = vmatprep.subr.bf16.mxu0 0
    %185 = vmatpush1.bf16.msra.mxu0 0
    %186 = vmatprep.mubr.bf16.mxu0 0
    %187 = vmatmul.mubr.bf16.gmra.mrb[0].mxu0 %v152
    %v188 = vpop.f32.mrb[0].mxu0
    %v189 = vadd.f32 0.0, %v188
    %v190 = vpop.f32.mrb[0].mxu0
    %v191 = vpop.f32.mrb[0].mxu0
    %v192 = vadd.f32 0.0, %v191
    %v193 = vpop.f32.mrb[0].mxu0
    %194 = vdwg.mxu0
    %v203 = vunpack.c.l.b16 %v30
    %v204 = vunpack.c.l.b16 %v31
    %v205 = vunpack.c.l.b16 %v32
    %v206 = vunpack.c.l.b16 %v33
    %v207 = vunpack.c.l.b16 %v34
    %v208 = vunpack.c.l.b16 %v35
    %v209 = vunpack.c.l.b16 %v36
    %v210 = vunpack.c.l.b16 %v37
    %v211 = vpack.c.b16 %v204, %v203
    %v212 = vpack.c.b16 %v206, %v205
    %v213 = vpack.c.b16 %v208, %v207
    %v214 = vpack.c.b16 %v210, %v209
    %v216 = vsel %vm86, %v211, 0
    %v219 = vsel %vm86, %v212, 0
    %v222 = vsel %vm86, %v213, 0
    %v225 = vsel %vm86, %v214, 0
    %227 = vmatprep.subr.bf16.mxu0 0
    %228 = vmatpush1.bf16.msra.mxu0 %v137
    %229 = vmatprep.subr.bf16.mxu0 0
    %230 = vmatpush1.bf16.msra.mxu0 %v138
    %231 = vmatprep.subr.bf16.mxu0 0
    %232 = vmatpush1.bf16.msra.mxu0 0
    %233 = vmatprep.subr.bf16.mxu0 0
    %234 = vmatpush1.bf16.msra.mxu0 0
    %235 = vmatprep.subr.bf16.mxu0 0
    %236 = vmatpush1.bf16.msra.mxu0 0
    %237 = vmatprep.subr.bf16.mxu0 0
    %238 = vmatpush1.bf16.msra.mxu0 0
    %239 = vmatprep.subr.bf16.mxu0 0
    %240 = vmatpush1.bf16.msra.mxu0 0
    %241 = vmatprep.subr.bf16.mxu0 0
    %242 = vmatpush1.bf16.msra.mxu0 0
    %243 = vmatprep.subr.bf16.mxu0 0
    %244 = vmatpush1.bf16.msra.mxu0 0
    %245 = vmatprep.subr.bf16.mxu0 0
    %246 = vmatpush1.bf16.msra.mxu0 0
    %247 = vmatprep.subr.bf16.mxu0 0
    %248 = vmatpush1.bf16.msra.mxu0 0
    %249 = vmatprep.subr.bf16.mxu0 0
    %250 = vmatpush1.bf16.msra.mxu0 0
    %251 = vmatprep.subr.bf16.mxu0 0
    %252 = vmatpush1.bf16.msra.mxu0 0
    %253 = vmatprep.subr.bf16.mxu0 0
    %254 = vmatpush1.bf16.msra.mxu0 0
    %255 = vmatprep.subr.bf16.mxu0 0
    %256 = vmatpush1.bf16.msra.mxu0 0
    %257 = vmatprep.subr.bf16.mxu0 0
    %258 = vmatpush1.bf16.msra.mxu0 0
    %259 = vmatprep.mubr.bf16.mxu0 0
    %260 = vmatmul.mubr.bf16.gmra.mrb[0].mxu0 %v216
    %v261 = vpop.f32.mrb[0].mxu0
    %v262 = vadd.f32 0.0, %v261
    %v263 = vpop.f32.mrb[0].mxu0
    %v264 = vpop.f32.mrb[0].mxu0
    %v265 = vadd.f32 0.0, %v264
    %v266 = vpop.f32.mrb[0].mxu0
    %267 = vmatprep.mubr.bf16.mxu0 0
    %268 = vmatmul.mubr.bf16.gmra.mrb[0].mxu0 %v219
    %v269 = vpop.f32.mrb[0].mxu0
    %v270 = vadd.f32 0.0, %v269
    %v271 = vpop.f32.mrb[0].mxu0
    %v272 = vpop.f32.mrb[0].mxu0
    %v273 = vadd.f32 0.0, %v272
    %v274 = vpop.f32.mrb[0].mxu0
    %275 = vmatprep.mubr.bf16.mxu0 0
    %276 = vmatmul.mubr.bf16.gmra.mrb[0].mxu0 %v222
    %v277 = vpop.f32.mrb[0].mxu0
    %v278 = vadd.f32 0.0, %v277
    %v279 = vpop.f32.mrb[0].mxu0
    %v280 = vpop.f32.mrb[0].mxu0
    %v281 = vadd.f32 0.0, %v280
    %v282 = vpop.f32.mrb[0].mxu0
    %283 = vmatprep.mubr.bf16.mxu0 0
    %284 = vmatmul.mubr.bf16.gmra.mrb[0].mxu0 %v225
    %v285 = vpop.f32.mrb[0].mxu0
    %v286 = vadd.f32 0.0, %v285
    %v287 = vpop.f32.mrb[0].mxu0
    %v288 = vpop.f32.mrb[0].mxu0
    %v289 = vadd.f32 0.0, %v288
    %v290 = vpop.f32.mrb[0].mxu0
    %291 = vdwg.mxu0
    %v296 = vunpack.c.l.b16 %v58
    %v297 = vunpack.c.l.b16 %v59
    %v298 = vunpack.c.l.b16 %v60
    %v299 = vunpack.c.l.b16 %v61
    %v300 = vpack.c.b16 %v297, %v296
    %v301 = vpack.c.b16 %v299, %v298
    %v305 = vsel %vm86, %v103, 0
    %v308 = vsel %vm86, %v104, 0
    %310 = vmatprep.subr.bf16.mxu0 0
    %311 = vmatpush1.bf16.msra.mxu0 %v300
    %312 = vmatprep.subr.bf16.mxu0 0
    %313 = vmatpush1.bf16.msra.mxu0 %v301
    %314 = vmatprep.subr.bf16.mxu0 0
    %315 = vmatpush1.bf16.msra.mxu0 0
    %316 = vmatprep.subr.bf16.mxu0 0
    %317 = vmatpush1.bf16.msra.mxu0 0
    %318 = vmatprep.subr.bf16.mxu0 0
    %319 = vmatpush1.bf16.msra.mxu0 0
    %320 = vmatprep.subr.bf16.mxu0 0
    %321 = vmatpush1.bf16.msra.mxu0 0
    %322 = vmatprep.subr.bf16.mxu0 0
    %323 = vmatpush1.bf16.msra.mxu0 0
    %324 = vmatprep.subr.bf16.mxu0 0
    %325 = vmatpush1.bf16.msra.mxu0 0
    %326 = vmatprep.subr.bf16.mxu0 0
    %327 = vmatpush1.bf16.msra.mxu0 0
    %328 = vmatprep.subr.bf16.mxu0 0
    %329 = vmatpush1.bf16.msra.mxu0 0
    %330 = vmatprep.subr.bf16.mxu0 0
    %331 = vmatpush1.bf16.msra.mxu0 0
    %332 = vmatprep.subr.bf16.mxu0 0
    %333 = vmatpush1.bf16.msra.mxu0 0
    %334 = vmatprep.subr.bf16.mxu0 0
    %335 = vmatpush1.bf16.msra.mxu0 0
    %336 = vmatprep.subr.bf16.mxu0 0
    %337 = vmatpush1.bf16.msra.mxu0 0
    %338 = vmatprep.subr.bf16.mxu0 0
    %339 = vmatpush1.bf16.msra.mxu0 0
    %340 = vmatprep.subr.bf16.mxu0 0
    %341 = vmatpush1.bf16.msra.mxu0 0
    %342 = vmatprep.mubr.bf16.mxu0 0
    %343 = vmatmul.mubr.bf16.gmra.mrb[0].mxu0 %v305
    %v344 = vpop.f32.mrb[0].mxu0
    %v345 = vadd.f32 0.0, %v344
    %v346 = vpop.f32.mrb[0].mxu0
    %v347 = vpop.f32.mrb[0].mxu0
    %v348 = vadd.f32 0.0, %v347
    %v349 = vpop.f32.mrb[0].mxu0
    %350 = vmatprep.mubr.bf16.mxu0 0
    %351 = vmatmul.mubr.bf16.gmra.mrb[0].mxu0 %v308
    %v352 = vpop.f32.mrb[0].mxu0
    %v353 = vadd.f32 0.0, %v352
    %v354 = vpop.f32.mrb[0].mxu0
    %v355 = vpop.f32.mrb[0].mxu0
    %v356 = vadd.f32 0.0, %v355
    %v357 = vpop.f32.mrb[0].mxu0
    %358 = vdwg.mxu0
    %v359 = vmul.f32 %v189, %v28
    %v360 = vmul.f32 %v192, %v29
    %v361 = vmul.f32 %v262, %v46
    %v362 = vmul.f32 %v265, %v47
    %v363 = vmul.f32 %v270, %v48
    %v364 = vmul.f32 %v273, %v49
    %v365 = vmul.f32 %v278, %v50
    %v366 = vmul.f32 %v281, %v51
    %v367 = vmul.f32 %v286, %v52
    %v368 = vmul.f32 %v289, %v53
    %371 = vrot.lane.b32.xlu0 %v359, 120
    %v372 = vpop.permute.xlu0 %371
    %373 = vrot.lane.b32.xlu0 %v360, 120
    %v374 = vpop.permute.xlu0 %373
    %v377 = vadd.f32 %v359, %v372
    %v378 = vadd.f32 %v360, %v374
    %v379 = vpack.c.bf16 %v378, %v377
    %v380 = vadd.f32 %v361, %v362
    %v381 = vpack.c.bf16 %v380, %v380
    %vm382 = vcmask 64512
    %v384 = vsel %vm382, %v379, 0
    %vm386 = vcmask 1043456
    %v388 = vsel %vm386, %v381, 0
    %390 = vmatprep.subr.bf16.mxu0 0
    %391 = vmatpush1.bf16.msra.mxu0 %v388
    %392 = vmatprep.subr.bf16.mxu0 0
    %393 = vmatpush1.bf16.msra.mxu0 0
    %394 = vmatprep.subr.bf16.mxu0 0
    %395 = vmatpush1.bf16.msra.mxu0 0
    %396 = vmatprep.subr.bf16.mxu0 0
    %397 = vmatpush1.bf16.msra.mxu0 0
    %398 = vmatprep.subr.bf16.mxu0 0
    %399 = vmatpush1.bf16.msra.mxu0 0
    %400 = vmatprep.subr.bf16.mxu0 0
    %401 = vmatpush1.bf16.msra.mxu0 0
    %402 = vmatprep.subr.bf16.mxu0 0
    %403 = vmatpush1.bf16.msra.mxu0 0
    %404 = vmatprep.subr.bf16.mxu0 0
    %405 = vmatpush1.bf16.msra.mxu0 0
    %406 = vmatprep.subr.bf16.mxu0 0
    %407 = vmatpush1.bf16.msra.mxu0 0
    %408 = vmatprep.subr.bf16.mxu0 0
    %409 = vmatpush1.bf16.msra.mxu0 0
    %410 = vmatprep.subr.bf16.mxu0 0
    %411 = vmatpush1.bf16.msra.mxu0 0
    %412 = vmatprep.subr.bf16.mxu0 0
    %413 = vmatpush1.bf16.msra.mxu0 0
    %414 = vmatprep.subr.bf16.mxu0 0
    %415 = vmatpush1.bf16.msra.mxu0 0
    %416 = vmatprep.subr.bf16.mxu0 0
    %417 = vmatpush1.bf16.msra.mxu0 0
    %418 = vmatprep.subr.bf16.mxu0 0
    %419 = vmatpush1.bf16.msra.mxu0 0
    %420 = vmatprep.subr.bf16.mxu0 0
    %421 = vmatpush1.bf16.msra.mxu0 0
    %422 = vmatprep.mubr.bf16.mxu0 0
    %423 = vmatmul.mubr.bf16.gmra.mrb[0].mxu0 %v384
    %v424 = vpop.f32.mrb[0].mxu0
    %v425 = vadd.f32 %v56, %v424
    %v426 = vpop.f32.mrb[0].mxu0
    %v427 = vpop.f32.mrb[0].mxu0
    %v428 = vadd.f32 %v57, %v427
    %v429 = vpop.f32.mrb[0].mxu0
    %430 = vdwg.mxu0
    %v431 = vsel %vm86, %v425, -inf
    %432 = vmax.xlane.f32.xlu0 %v431
    %v433 = vpop.xlane.xlu0 %432
    %v434 = vsel %vm86, %v428, -inf
    %435 = vmax.xlane.f32.xlu0 %v434
    %v436 = vpop.xlane.xlu0 %435
    %v437 = vsub.f32 %v425, %v433
    %v438 = vsub.f32 %v428, %v436
    %v439 = vmul.f32 %v437, 1.442695
    %v440 = vpow.pop %v439
    %v441 = vmul.f32 %v438, 1.442695
    %v442 = vpow.pop %v441
    %v443 = vsel %vm86, %v440, 0.0
    %444 = vadd.xlane.f32.xlu0 %v443
    %v445 = vpop.xlane.xlu0 %444
    %v446 = vsel %vm86, %v442, 0.0
    %447 = vadd.xlane.f32.xlu0 %v446
    %v448 = vpop.xlane.xlu0 %447
    %v449 = vrcp.pop %v445
    %v450 = vrcp.pop %v448
    %v451 = vmul.f32 %v440, %v449
    %v452 = vmul.f32 %v442, %v450
    %v453 = vpack.c.bf16 %v348, %v345
    %v454 = vpack.c.bf16 %v356, %v353
    %v455 = vpack.c.bf16 %v452, %v451
    %v457 = vsel %vm86, %v455, 0
    %459 = vmatprep.subr.bf16.mxu0 0
    %460 = vmatpush1.bf16.msra.mxu0 %v453
    %461 = vmatprep.subr.bf16.mxu0 0
    %462 = vmatpush1.bf16.msra.mxu0 %v454
    %463 = vmatprep.subr.bf16.mxu0 0
    %464 = vmatpush1.bf16.msra.mxu0 0
    %465 = vmatprep.subr.bf16.mxu0 0
    %466 = vmatpush1.bf16.msra.mxu0 0
    %467 = vmatprep.subr.bf16.mxu0 0
    %468 = vmatpush1.bf16.msra.mxu0 0
    %469 = vmatprep.subr.bf16.mxu0 0
    %470 = vmatpush1.bf16.msra.mxu0 0
    %471 = vmatprep.subr.bf16.mxu0 0
    %472 = vmatpush1.bf16.msra.mxu0 0
    %473 = vmatprep.subr.bf16.mxu0 0
    %474 = vmatpush1.bf16.msra.mxu0 0
    %475 = vmatprep.subr.bf16.mxu0 0
    %476 = vmatpush1.bf16.msra.mxu0 0
    %477 = vmatprep.subr.bf16.mxu0 0
    %478 = vmatpush1.bf16.msra.mxu0 0
    %479 = vmatprep.subr.bf16.mxu0 0
    %480 = vmatpush1.bf16.msra.mxu0 0
    %481 = vmatprep.subr.bf16.mxu0 0
    %482 = vmatpush1.bf16.msra.mxu0 0
    %483 = vmatprep.subr.bf16.mxu0 0
    %484 = vmatpush1.bf16.msra.mxu0 0
    %485 = vmatprep.subr.bf16.mxu0 0
    %486 = vmatpush1.bf16.msra.mxu0 0
    %487 = vmatprep.subr.bf16.mxu0 0
    %488 = vmatpush1.bf16.msra.mxu0 0
    %489 = vmatprep.subr.bf16.mxu0 0
    %490 = vmatpush1.bf16.msra.mxu0 0
    %491 = vmatprep.mubr.bf16.mxu0 0
    %492 = vmatmul.mubr.bf16.gmra.mrb[0].mxu0 %v457
    %v493 = vpop.f32.mrb[0].mxu0
    %v494 = vadd.f32 0.0, %v493
    %v495 = vpop.f32.mrb[0].mxu0
    %v496 = vpop.f32.mrb[0].mxu0
    %v497 = vadd.f32 0.0, %v496
    %v498 = vpop.f32.mrb[0].mxu0
    %499 = vdwg.mxu0
    %v500 = vadd.f32 %v363, %v364
    %v501 = vpack.c.bf16 %v500, %v500
    %503 = vrot.lane.b32.xlu0 %v379, 112
    %v504 = vpop.permute.xlu0 %503
    %v506 = vsel %vm382, %v504, 0
    %v509 = vsel %vm386, %v501, 0
    %511 = vmatprep.subr.bf16.mxu0 0
    %512 = vmatpush1.bf16.msra.mxu0 %v509
    %513 = vmatprep.subr.bf16.mxu0 0
    %514 = vmatpush1.bf16.msra.mxu0 0
    %515 = vmatprep.subr.bf16.mxu0 0
    %516 = vmatpush1.bf16.msra.mxu0 0
    %517 = vmatprep.subr.bf16.mxu0 0
    %518 = vmatpush1.bf16.msra.mxu0 0
    %519 = vmatprep.subr.bf16.mxu0 0
    %520 = vmatpush1.bf16.msra.mxu0 0
    %521 = vmatprep.subr.bf16.mxu0 0
    %522 = vmatpush1.bf16.msra.mxu0 0
    %523 = vmatprep.subr.bf16.mxu0 0
    %524 = vmatpush1.bf16.msra.mxu0 0
    %525 = vmatprep.subr.bf16.mxu0 0
    %526 = vmatpush1.bf16.msra.mxu0 0
    %527 = vmatprep.subr.bf16.mxu0 0
    %528 = vmatpush1.bf16.msra.mxu0 0
    %529 = vmatprep.subr.bf16.mxu0 0
    %530 = vmatpush1.bf16.msra.mxu0 0
    %531 = vmatprep.subr.bf16.mxu0 0
    %532 = vmatpush1.bf16.msra.mxu0 0
    %533 = vmatprep.subr.bf16.mxu0 0
    %534 = vmatpush1.bf16.msra.mxu0 0
    %535 = vmatprep.subr.bf16.mxu0 0
    %536 = vmatpush1.bf16.msra.mxu0 0
    %537 = vmatprep.subr.bf16.mxu0 0
    %538 = vmatpush1.bf16.msra.mxu0 0
    %539 = vmatprep.subr.bf16.mxu0 0
    %540 = vmatpush1.bf16.msra.mxu0 0
    %541 = vmatprep.subr.bf16.mxu0 0
    %542 = vmatpush1.bf16.msra.mxu0 0
    %543 = vmatprep.mubr.bf16.mxu0 0
    %544 = vmatmul.mubr.bf16.gmra.mrb[0].mxu0 %v506
    %v545 = vpop.f32.mrb[0].mxu0
    %v546 = vadd.f32 %v56, %v545
    %v547 = vpop.f32.mrb[0].mxu0
    %v548 = vpop.f32.mrb[0].mxu0
    %v549 = vadd.f32 %v57, %v548
    %v550 = vpop.f32.mrb[0].mxu0
    %551 = vdwg.mxu0
    %v552 = vsel %vm86, %v546, -inf
    %553 = vmax.xlane.f32.xlu0 %v552
    %v554 = vpop.xlane.xlu0 %553
    %v555 = vsel %vm86, %v549, -inf
    %556 = vmax.xlane.f32.xlu0 %v555
    %v557 = vpop.xlane.xlu0 %556
    %v558 = vsub.f32 %v546, %v554
    %v559 = vsub.f32 %v549, %v557
    %v560 = vmul.f32 %v558, 1.442695
    %v561 = vpow.pop %v560
    %v562 = vmul.f32 %v559, 1.442695
    %v563 = vpow.pop %v562
    %v564 = vsel %vm86, %v561, 0.0
    %565 = vadd.xlane.f32.xlu0 %v564
    %v566 = vpop.xlane.xlu0 %565
    %v567 = vsel %vm86, %v563, 0.0
    %568 = vadd.xlane.f32.xlu0 %v567
    %v569 = vpop.xlane.xlu0 %568
    %v570 = vrcp.pop %v566
    %v571 = vrcp.pop %v569
    %v572 = vmul.f32 %v561, %v570
    %v573 = vmul.f32 %v563, %v571
    %v574 = vpack.c.bf16 %v573, %v572
    %577 = vrot.lane.b32.xlu0 %v453, 120
    %v578 = vpop.permute.xlu0 %577
    %579 = vrot.lane.b32.xlu0 %v454, 120
    %v580 = vpop.permute.xlu0 %579
    %v584 = vsel %vm86, %v574, 0
    %586 = vmatprep.subr.bf16.mxu0 0
    %587 = vmatpush1.bf16.msra.mxu0 %v578
    %588 = vmatprep.subr.bf16.mxu0 0
    %589 = vmatpush1.bf16.msra.mxu0 %v580
    %590 = vmatprep.subr.bf16.mxu0 0
    %591 = vmatpush1.bf16.msra.mxu0 0
    %592 = vmatprep.subr.bf16.mxu0 0
    %593 = vmatpush1.bf16.msra.mxu0 0
    %594 = vmatprep.subr.bf16.mxu0 0
    %595 = vmatpush1.bf16.msra.mxu0 0
    %596 = vmatprep.subr.bf16.mxu0 0
    %597 = vmatpush1.bf16.msra.mxu0 0
    %598 = vmatprep.subr.bf16.mxu0 0
    %599 = vmatpush1.bf16.msra.mxu0 0
    %600 = vmatprep.subr.bf16.mxu0 0
    %601 = vmatpush1.bf16.msra.mxu0 0
    %602 = vmatprep.subr.bf16.mxu0 0
    %603 = vmatpush1.bf16.msra.mxu0 0
    %604 = vmatprep.subr.bf16.mxu0 0
    %605 = vmatpush1.bf16.msra.mxu0 0
    %606 = vmatprep.subr.bf16.mxu0 0
    %607 = vmatpush1.bf16.msra.mxu0 0
    %608 = vmatprep.subr.bf16.mxu0 0
    %609 = vmatpush1.bf16.msra.mxu0 0
    %610 = vmatprep.subr.bf16.mxu0 0
    %611 = vmatpush1.bf16.msra.mxu0 0
    %612 = vmatprep.subr.bf16.mxu0 0
    %613 = vmatpush1.bf16.msra.mxu0 0
    %614 = vmatprep.subr.bf16.mxu0 0
    %615 = vmatpush1.bf16.msra.mxu0 0
    %616 = vmatprep.subr.bf16.mxu0 0
    %617 = vmatpush1.bf16.msra.mxu0 0
    %618 = vmatprep.mubr.bf16.mxu0 0
    %619 = vmatmul.mubr.bf16.gmra.mrb[0].mxu0 %v584
    %v620 = vpop.f32.mrb[0].mxu0
    %v621 = vadd.f32 0.0, %v620
    %v622 = vpop.f32.mrb[0].mxu0
    %v623 = vpop.f32.mrb[0].mxu0
    %v624 = vadd.f32 0.0, %v623
    %v625 = vpop.f32.mrb[0].mxu0
    %626 = vdwg.mxu0
    %v627 = vadd.f32 %v365, %v366
    %v628 = vpack.c.bf16 %v627, %v627
    %629 = vrot.lane.b32.xlu0 %v379, 96
    %v630 = vpop.permute.xlu0 %629
    %v632 = vsel %vm382, %v630, 0
    %v635 = vsel %vm386, %v628, 0
    %637 = vmatprep.subr.bf16.mxu0 0
    %638 = vmatpush1.bf16.msra.mxu0 %v635
    %639 = vmatprep.subr.bf16.mxu0 0
    %640 = vmatpush1.bf16.msra.mxu0 0
    %641 = vmatprep.subr.bf16.mxu0 0
    %642 = vmatpush1.bf16.msra.mxu0 0
    %643 = vmatprep.subr.bf16.mxu0 0
    %644 = vmatpush1.bf16.msra.mxu0 0
    %645 = vmatprep.subr.bf16.mxu0 0
    %646 = vmatpush1.bf16.msra.mxu0 0
    %647 = vmatprep.subr.bf16.mxu0 0
    %648 = vmatpush1.bf16.msra.mxu0 0
    %649 = vmatprep.subr.bf16.mxu0 0
    %650 = vmatpush1.bf16.msra.mxu0 0
    %651 = vmatprep.subr.bf16.mxu0 0
    %652 = vmatpush1.bf16.msra.mxu0 0
    %653 = vmatprep.subr.bf16.mxu0 0
    %654 = vmatpush1.bf16.msra.mxu0 0
    %655 = vmatprep.subr.bf16.mxu0 0
    %656 = vmatpush1.bf16.msra.mxu0 0
    %657 = vmatprep.subr.bf16.mxu0 0
    %658 = vmatpush1.bf16.msra.mxu0 0
    %659 = vmatprep.subr.bf16.mxu0 0
    %660 = vmatpush1.bf16.msra.mxu0 0
    %661 = vmatprep.subr.bf16.mxu0 0
    %662 = vmatpush1.bf16.msra.mxu0 0
    %663 = vmatprep.subr.bf16.mxu0 0
    %664 = vmatpush1.bf16.msra.mxu0 0
    %665 = vmatprep.subr.bf16.mxu0 0
    %666 = vmatpush1.bf16.msra.mxu0 0
    %667 = vmatprep.subr.bf16.mxu0 0
    %668 = vmatpush1.bf16.msra.mxu0 0
    %669 = vmatprep.mubr.bf16.mxu0 0
    %670 = vmatmul.mubr.bf16.gmra.mrb[0].mxu0 %v632
    %v671 = vpop.f32.mrb[0].mxu0
    %v672 = vadd.f32 %v56, %v671
    %v673 = vpop.f32.mrb[0].mxu0
    %v674 = vpop.f32.mrb[0].mxu0
    %v675 = vadd.f32 %v57, %v674
    %v676 = vpop.f32.mrb[0].mxu0
    %677 = vdwg.mxu0
    %v678 = vsel %vm86, %v672, -inf
    %679 = vmax.xlane.f32.xlu0 %v678
    %v680 = vpop.xlane.xlu0 %679
    %v681 = vsel %vm86, %v675, -inf
    %682 = vmax.xlane.f32.xlu0 %v681
    %v683 = vpop.xlane.xlu0 %682
    %v684 = vsub.f32 %v672, %v680
    %v685 = vsub.f32 %v675, %v683
    %v686 = vmul.f32 %v684, 1.442695
    %v687 = vpow.pop %v686
    %v688 = vmul.f32 %v685, 1.442695
    %v689 = vpow.pop %v688
    %v690 = vsel %vm86, %v687, 0.0
    %691 = vadd.xlane.f32.xlu0 %v690
    %v692 = vpop.xlane.xlu0 %691
    %v693 = vsel %vm86, %v689, 0.0
    %694 = vadd.xlane.f32.xlu0 %v693
    %v695 = vpop.xlane.xlu0 %694
    %v696 = vrcp.pop %v692
    %v697 = vrcp.pop %v695
    %v698 = vmul.f32 %v687, %v696
    %v699 = vmul.f32 %v689, %v697
    %v700 = vpack.c.bf16 %v699, %v698
    %701 = vrot.lane.b32.xlu0 %v453, 112
    %v702 = vpop.permute.xlu0 %701
    %703 = vrot.lane.b32.xlu0 %v454, 112
    %v704 = vpop.permute.xlu0 %703
    %v708 = vsel %vm86, %v700, 0
    %710 = vmatprep.subr.bf16.mxu0 0
    %711 = vmatpush1.bf16.msra.mxu0 %v702
    %712 = vmatprep.subr.bf16.mxu0 0
    %713 = vmatpush1.bf16.msra.mxu0 %v704
    %714 = vmatprep.subr.bf16.mxu0 0
    %715 = vmatpush1.bf16.msra.mxu0 0
    %716 = vmatprep.subr.bf16.mxu0 0
    %717 = vmatpush1.bf16.msra.mxu0 0
    %718 = vmatprep.subr.bf16.mxu0 0
    %719 = vmatpush1.bf16.msra.mxu0 0
    %720 = vmatprep.subr.bf16.mxu0 0
    %721 = vmatpush1.bf16.msra.mxu0 0
    %722 = vmatprep.subr.bf16.mxu0 0
    %723 = vmatpush1.bf16.msra.mxu0 0
    %724 = vmatprep.subr.bf16.mxu0 0
    %725 = vmatpush1.bf16.msra.mxu0 0
    %726 = vmatprep.subr.bf16.mxu0 0
    %727 = vmatpush1.bf16.msra.mxu0 0
    %728 = vmatprep.subr.bf16.mxu0 0
    %729 = vmatpush1.bf16.msra.mxu0 0
    %730 = vmatprep.subr.bf16.mxu0 0
    %731 = vmatpush1.bf16.msra.mxu0 0
    %732 = vmatprep.subr.bf16.mxu0 0
    %733 = vmatpush1.bf16.msra.mxu0 0
    %734 = vmatprep.subr.bf16.mxu0 0
    %735 = vmatpush1.bf16.msra.mxu0 0
    %736 = vmatprep.subr.bf16.mxu0 0
    %737 = vmatpush1.bf16.msra.mxu0 0
    %738 = vmatprep.subr.bf16.mxu0 0
    %739 = vmatpush1.bf16.msra.mxu0 0
    %740 = vmatprep.subr.bf16.mxu0 0
    %741 = vmatpush1.bf16.msra.mxu0 0
    %742 = vmatprep.mubr.bf16.mxu0 0
    %743 = vmatmul.mubr.bf16.gmra.mrb[0].mxu0 %v708
    %v744 = vpop.f32.mrb[0].mxu0
    %v745 = vadd.f32 0.0, %v744
    %v746 = vpop.f32.mrb[0].mxu0
    %v747 = vpop.f32.mrb[0].mxu0
    %v748 = vadd.f32 0.0, %v747
    %v749 = vpop.f32.mrb[0].mxu0
    %750 = vdwg.mxu0
    %v751 = vadd.f32 %v367, %v368
    %v752 = vpack.c.bf16 %v751, %v751
    %753 = vrot.lane.b32.xlu0 %v379, 80
    %v754 = vpop.permute.xlu0 %753
    %v756 = vsel %vm382, %v754, 0
    %v759 = vsel %vm386, %v752, 0
    %761 = vmatprep.subr.bf16.mxu0 0
    %762 = vmatpush1.bf16.msra.mxu0 %v759
    %763 = vmatprep.subr.bf16.mxu0 0
    %764 = vmatpush1.bf16.msra.mxu0 0
    %765 = vmatprep.subr.bf16.mxu0 0
    %766 = vmatpush1.bf16.msra.mxu0 0
    %767 = vmatprep.subr.bf16.mxu0 0
    %768 = vmatpush1.bf16.msra.mxu0 0
    %769 = vmatprep.subr.bf16.mxu0 0
    %770 = vmatpush1.bf16.msra.mxu0 0
    %771 = vmatprep.subr.bf16.mxu0 0
    %772 = vmatpush1.bf16.msra.mxu0 0
    %773 = vmatprep.subr.bf16.mxu0 0
    %774 = vmatpush1.bf16.msra.mxu0 0
    %775 = vmatprep.subr.bf16.mxu0 0
    %776 = vmatpush1.bf16.msra.mxu0 0
    %777 = vmatprep.subr.bf16.mxu0 0
    %778 = vmatpush1.bf16.msra.mxu0 0
    %779 = vmatprep.subr.bf16.mxu0 0
    %780 = vmatpush1.bf16.msra.mxu0 0
    %781 = vmatprep.subr.bf16.mxu0 0
    %782 = vmatpush1.bf16.msra.mxu0 0
    %783 = vmatprep.subr.bf16.mxu0 0
    %784 = vmatpush1.bf16.msra.mxu0 0
    %785 = vmatprep.subr.bf16.mxu0 0
    %786 = vmatpush1.bf16.msra.mxu0 0
    %787 = vmatprep.subr.bf16.mxu0 0
    %788 = vmatpush1.bf16.msra.mxu0 0
    %789 = vmatprep.subr.bf16.mxu0 0
    %790 = vmatpush1.bf16.msra.mxu0 0
    %791 = vmatprep.subr.bf16.mxu0 0
    %792 = vmatpush1.bf16.msra.mxu0 0
    %793 = vmatprep.mubr.bf16.mxu0 0
    %794 = vmatmul.mubr.bf16.gmra.mrb[0].mxu0 %v756
    %v795 = vpop.f32.mrb[0].mxu0
    %v796 = vadd.f32 %v56, %v795
    %v797 = vpop.f32.mrb[0].mxu0
    %v798 = vpop.f32.mrb[0].mxu0
    %v799 = vadd.f32 %v57, %v798
    %v800 = vpop.f32.mrb[0].mxu0
    %801 = vdwg.mxu0
    %v802 = vsel %vm86, %v796, -inf
    %803 = vmax.xlane.f32.xlu0 %v802
    %v804 = vpop.xlane.xlu0 %803
    %v805 = vsel %vm86, %v799, -inf
    %806 = vmax.xlane.f32.xlu0 %v805
    %v807 = vpop.xlane.xlu0 %806
    %v808 = vsub.f32 %v796, %v804
    %v809 = vsub.f32 %v799, %v807
    %v810 = vmul.f32 %v808, 1.442695
    %v811 = vpow.pop %v810
    %v812 = vmul.f32 %v809, 1.442695
    %v813 = vpow.pop %v812
    %v814 = vsel %vm86, %v811, 0.0
    %815 = vadd.xlane.f32.xlu0 %v814
    %v816 = vpop.xlane.xlu0 %815
    %v817 = vsel %vm86, %v813, 0.0
    %818 = vadd.xlane.f32.xlu0 %v817
    %v819 = vpop.xlane.xlu0 %818
    %v820 = vrcp.pop %v816
    %v821 = vrcp.pop %v819
    %v822 = vmul.f32 %v811, %v820
    %v823 = vmul.f32 %v813, %v821
    %v824 = vpack.c.bf16 %v823, %v822
    %825 = vrot.lane.b32.xlu0 %v453, 104
    %v826 = vpop.permute.xlu0 %825
    %827 = vrot.lane.b32.xlu0 %v454, 104
    %v828 = vpop.permute.xlu0 %827
    %v832 = vsel %vm86, %v824, 0
    %834 = vmatprep.subr.bf16.mxu0 0
    %835 = vmatpush1.bf16.msra.mxu0 %v826
    %836 = vmatprep.subr.bf16.mxu0 0
    %837 = vmatpush1.bf16.msra.mxu0 %v828
    %838 = vmatprep.subr.bf16.mxu0 0
    %839 = vmatpush1.bf16.msra.mxu0 0
    %840 = vmatprep.subr.bf16.mxu0 0
    %841 = vmatpush1.bf16.msra.mxu0 0
    %842 = vmatprep.subr.bf16.mxu0 0
    %843 = vmatpush1.bf16.msra.mxu0 0
    %844 = vmatprep.subr.bf16.mxu0 0
    %845 = vmatpush1.bf16.msra.mxu0 0
    %846 = vmatprep.subr.bf16.mxu0 0
    %847 = vmatpush1.bf16.msra.mxu0 0
    %848 = vmatprep.subr.bf16.mxu0 0
    %849 = vmatpush1.bf16.msra.mxu0 0
    %850 = vmatprep.subr.bf16.mxu0 0
    %851 = vmatpush1.bf16.msra.mxu0 0
    %852 = vmatprep.subr.bf16.mxu0 0
    %853 = vmatpush1.bf16.msra.mxu0 0
    %854 = vmatprep.subr.bf16.mxu0 0
    %855 = vmatpush1.bf16.msra.mxu0 0
    %856 = vmatprep.subr.bf16.mxu0 0
    %857 = vmatpush1.bf16.msra.mxu0 0
    %858 = vmatprep.subr.bf16.mxu0 0
    %859 = vmatpush1.bf16.msra.mxu0 0
    %860 = vmatprep.subr.bf16.mxu0 0
    %861 = vmatpush1.bf16.msra.mxu0 0
    %862 = vmatprep.subr.bf16.mxu0 0
    %863 = vmatpush1.bf16.msra.mxu0 0
    %864 = vmatprep.subr.bf16.mxu0 0
    %865 = vmatpush1.bf16.msra.mxu0 0
    %866 = vmatprep.mubr.bf16.mxu0 0
    %867 = vmatmul.mubr.bf16.gmra.mrb[0].mxu0 %v832
    %v868 = vpop.f32.mrb[0].mxu0
    %v869 = vadd.f32 0.0, %v868
    %v870 = vpop.f32.mrb[0].mxu0
    %v871 = vpop.f32.mrb[0].mxu0
    %v872 = vadd.f32 0.0, %v871
    %v873 = vpop.f32.mrb[0].mxu0
    %874 = vdwg.mxu0
    %877 = vrot.lane.b32.xlu0 %v621, 8
    %v878 = vpop.permute.xlu0 %877
    %879 = vrot.lane.b32.xlu0 %v624, 8
    %v880 = vpop.permute.xlu0 %879
    %885 = vrot.lane.b32.xlu0 %v745, 16
    %v886 = vpop.permute.xlu0 %885
    %887 = vrot.lane.b32.xlu0 %v748, 16
    %v888 = vpop.permute.xlu0 %887
    %893 = vrot.lane.b32.xlu0 %v869, 24
    %v894 = vpop.permute.xlu0 %893
    %895 = vrot.lane.b32.xlu0 %v872, 24
    %v896 = vpop.permute.xlu0 %895
    %v899 = vsel %vm382, %v494, %v878
    %v900 = vsel %vm382, %v497, %v880
    %vm901 = vcmask 130048
    %v902 = vsel %vm901, %v899, %v886
    %v903 = vsel %vm901, %v900, %v888
    %vm904 = vcmask 195584
    %v905 = vsel %vm904, %v902, %v894
    %v906 = vsel %vm904, %v903, %v896
    %v907 = vpack.c.bf16 %v906, %v905
    %v912 = vunpack.c.l.b16 %v62
    %v913 = vunpack.c.l.b16 %v63
    %v914 = vunpack.c.l.b16 %v64
    %v915 = vunpack.c.l.b16 %v65
    %v916 = vpack.c.b16 %v913, %v912
    %v917 = vpack.c.b16 %v915, %v914
    %v921 = vsel %vm86, %v907, 0
    %923 = vmatprep.subr.bf16.mxu0 0
    %924 = vmatpush1.bf16.msra.mxu0 %v916
    %925 = vmatprep.subr.bf16.mxu0 0
    %926 = vmatpush1.bf16.msra.mxu0 %v917
    %927 = vmatprep.subr.bf16.mxu0 0
    %928 = vmatpush1.bf16.msra.mxu0 0
    %929 = vmatprep.subr.bf16.mxu0 0
    %930 = vmatpush1.bf16.msra.mxu0 0
    %931 = vmatprep.subr.bf16.mxu0 0
    %932 = vmatpush1.bf16.msra.mxu0 0
    %933 = vmatprep.subr.bf16.mxu0 0
    %934 = vmatpush1.bf16.msra.mxu0 0
    %935 = vmatprep.subr.bf16.mxu0 0
    %936 = vmatpush1.bf16.msra.mxu0 0
    %937 = vmatprep.subr.bf16.mxu0 0
    %938 = vmatpush1.bf16.msra.mxu0 0
    %939 = vmatprep.subr.bf16.mxu0 0
    %940 = vmatpush1.bf16.msra.mxu0 0
    %941 = vmatprep.subr.bf16.mxu0 0
    %942 = vmatpush1.bf16.msra.mxu0 0
    %943 = vmatprep.subr.bf16.mxu0 0
    %944 = vmatpush1.bf16.msra.mxu0 0
    %945 = vmatprep.subr.bf16.mxu0 0
    %946 = vmatpush1.bf16.msra.mxu0 0
    %947 = vmatprep.subr.bf16.mxu0 0
    %948 = vmatpush1.bf16.msra.mxu0 0
    %949 = vmatprep.subr.bf16.mxu0 0
    %950 = vmatpush1.bf16.msra.mxu0 0
    %951 = vmatprep.subr.bf16.mxu0 0
    %952 = vmatpush1.bf16.msra.mxu0 0
    %953 = vmatprep.subr.bf16.mxu0 0
    %954 = vmatpush1.bf16.msra.mxu0 0
    %955 = vmatprep.mubr.bf16.mxu0 0
    %956 = vmatmul.mubr.bf16.gmra.mrb[0].mxu0 %v921
    %v957 = vpop.f32.mrb[0].mxu0
    %v958 = vadd.f32 0.0, %v957
    %v959 = vpop.f32.mrb[0].mxu0
    %v960 = vpop.f32.mrb[0].mxu0
    %v961 = vadd.f32 0.0, %v960
    %v962 = vpop.f32.mrb[0].mxu0
    %963 = vdwg.mxu0
    %v964 = vadd.f32 %v78, %v958
    %v965 = vadd.f32 %v79, %v961
    %v966 = vmul.f32 %v964, %v964
    %v967 = vmul.f32 %v965, %v965
    %v968 = vsel %vm86, %v966, 0.0
    %969 = vadd.xlane.f32.xlu0 %v968
    %v970 = vpop.xlane.xlu0 %969
    %v971 = vsel %vm86, %v967, 0.0
    %972 = vadd.xlane.f32.xlu0 %v971
    %v973 = vpop.xlane.xlu0 %972
    %v974 = vmul.f32 %v970, %v93
    %v975 = vmul.f32 %v973, %v93
    %v976 = vadd.f32 %v974, 1.1920929e-07
    %v977 = vadd.f32 %v975, 1.1920929e-07
    %v978 = vrsqrt.pop %v976
    %v979 = vrsqrt.pop %v977
    %v980 = vmul.f32 %v964, %v978
    %v981 = vmul.f32 %v965, %v979
    %v982 = vpack.c.bf16 %v981, %v980
    %v987 = vunpack.c.l.b16 %v74
    %v988 = vunpack.c.l.b16 %v75
    %v989 = vunpack.c.l.b16 %v76
    %v990 = vunpack.c.l.b16 %v77
    %v991 = vpack.c.b16 %v988, %v987
    %v992 = vpack.c.b16 %v990, %v989
    %v996 = vsel %vm86, %v982, 0
    %998 = vmatprep.subr.bf16.mxu0 0
    %999 = vmatpush1.bf16.msra.mxu0 %v991
    %1000 = vmatprep.subr.bf16.mxu0 0
    %1001 = vmatpush1.bf16.msra.mxu0 %v992
    %1002 = vmatprep.subr.bf16.mxu0 0
    %1003 = vmatpush1.bf16.msra.mxu0 0
    %1004 = vmatprep.subr.bf16.mxu0 0
    %1005 = vmatpush1.bf16.msra.mxu0 0
    %1006 = vmatprep.subr.bf16.mxu0 0
    %1007 = vmatpush1.bf16.msra.mxu0 0
    %1008 = vmatprep.subr.bf16.mxu0 0
    %1009 = vmatpush1.bf16.msra.mxu0 0
    %1010 = vmatprep.subr.bf16.mxu0 0
    %1011 = vmatpush1.bf16.msra.mxu0 0
    %1012 = vmatprep.subr.bf16.mxu0 0
    %1013 = vmatpush1.bf16.msra.mxu0 0
    %1014 = vmatprep.subr.bf16.mxu0 0
    %1015 = vmatpush1.bf16.msra.mxu0 0
    %1016 = vmatprep.subr.bf16.mxu0 0
    %1017 = vmatpush1.bf16.msra.mxu0 0
    %1018 = vmatprep.subr.bf16.mxu0 0
    %1019 = vmatpush1.bf16.msra.mxu0 0
    %1020 = vmatprep.subr.bf16.mxu0 0
    %1021 = vmatpush1.bf16.msra.mxu0 0
    %1022 = vmatprep.subr.bf16.mxu0 0
    %1023 = vmatpush1.bf16.msra.mxu0 0
    %1024 = vmatprep.subr.bf16.mxu0 0
    %1025 = vmatpush1.bf16.msra.mxu0 0
    %1026 = vmatprep.subr.bf16.mxu0 0
    %1027 = vmatpush1.bf16.msra.mxu0 0
    %1028 = vmatprep.subr.bf16.mxu0 0
    %1029 = vmatpush1.bf16.msra.mxu0 0
    %1030 = vmatprep.mubr.bf16.mxu0 0
    %1031 = vmatmul.mubr.bf16.gmra.mrb[0].mxu0 %v996
    %v1032 = vpop.f32.mrb[0].mxu0
    %v1033 = vadd.f32 0.0, %v1032
    %v1034 = vpop.f32.mrb[0].mxu0
    %v1035 = vpop.f32.mrb[0].mxu0
    %v1036 = vadd.f32 0.0, %v1035
    %v1037 = vpop.f32.mrb[0].mxu0
    %1038 = vdwg.mxu0
    %v1039 = vxor.u32 %v1033, 2147483648
    %v1040 = vxor.u32 %v1036, 2147483648
    %v1041 = vmul.f32 %v1039, 1.442695
    %v1042 = vpow.pop %v1041
    %v1043 = vmul.f32 %v1040, 1.442695
    %v1044 = vpow.pop %v1043
    %v1045 = vadd.f32 %v1042, 1.0
    %v1046 = vadd.f32 %v1044, 1.0
    %v1047 = vrcp.pop %v1045
    %v1048 = vmul.f32 1.0, %v1047
    %v1049 = vrcp.pop %v1046
    %v1050 = vmul.f32 1.0, %v1049
    %v1051 = vmul.f32 %v1033, %v1048
    %v1052 = vmul.f32 %v1036, %v1050
    %1055 = vrot.lane.b32.xlu0 %v1033, 64
    %v1056 = vpop.permute.xlu0 %1055
    %1057 = vrot.lane.b32.xlu0 %v1036, 64
    %v1058 = vpop.permute.xlu0 %1057
    %v1061 = vmul.f32 %v1051, %v1056
    %v1062 = vmul.f32 %v1052, %v1058
    %v1063 = vpack.c.bf16 %v1062, %v1061
    %v1072 = vunpack.c.l.b16 %v66
    %v1073 = vunpack.c.l.b16 %v67
    %v1074 = vunpack.c.l.b16 %v68
    %v1075 = vunpack.c.l.b16 %v69
    %v1076 = vunpack.c.l.b16 %v70
    %v1077 = vunpack.c.l.b16 %v71
    %v1078 = vunpack.c.l.b16 %v72
    %v1079 = vunpack.c.l.b16 %v73
    %v1080 = vpack.c.b16 %v1073, %v1072
    %v1081 = vpack.c.b16 %v1075, %v1074
    %v1082 = vpack.c.b16 %v1077, %v1076
    %v1083 = vpack.c.b16 %v1079, %v1078
    %vm1088 = vcmask 523264
    %v1090 = vsel %vm1088, %v1063, 0
    %1092 = vmatprep.subr.bf16.mxu0 0
    %1093 = vmatpush1.bf16.msra.mxu0 %v1080
    %1094 = vmatprep.subr.bf16.mxu0 0
    %1095 = vmatpush1.bf16.msra.mxu0 %v1081
    %1096 = vmatprep.subr.bf16.mxu0 0
    %1097 = vmatpush1.bf16.msra.mxu0 %v1082
    %1098 = vmatprep.subr.bf16.mxu0 0
    %1099 = vmatpush1.bf16.msra.mxu0 %v1083
    %1100 = vmatprep.subr.bf16.mxu0 0
    %1101 = vmatpush1.bf16.msra.mxu0 0
    %1102 = vmatprep.subr.bf16.mxu0 0
    %1103 = vmatpush1.bf16.msra.mxu0 0
    %1104 = vmatprep.subr.bf16.mxu0 0
    %1105 = vmatpush1.bf16.msra.mxu0 0
    %1106 = vmatprep.subr.bf16.mxu0 0
    %1107 = vmatpush1.bf16.msra.mxu0 0
    %1108 = vmatprep.subr.bf16.mxu0 0
    %1109 = vmatpush1.bf16.msra.mxu0 0
    %1110 = vmatprep.subr.bf16.mxu0 0
    %1111 = vmatpush1.bf16.msra.mxu0 0
    %1112 = vmatprep.subr.bf16.mxu0 0
    %1113 = vmatpush1.bf16.msra.mxu0 0
    %1114 = vmatprep.subr.bf16.mxu0 0
    %1115 = vmatpush1.bf16.msra.mxu0 0
    %1116 = vmatprep.subr.bf16.mxu0 0
    %1117 = vmatpush1.bf16.msra.mxu0 0
    %1118 = vmatprep.subr.bf16.mxu0 0
    %1119 = vmatpush1.bf16.msra.mxu0 0
    %1120 = vmatprep.subr.bf16.mxu0 0
    %1121 = vmatpush1.bf16.msra.mxu0 0
    %1122 = vmatprep.subr.bf16.mxu0 0
    %1123 = vmatpush1.bf16.msra.mxu0 0
    %1124 = vmatprep.mubr.bf16.mxu0 0
    %1125 = vmatmul.mubr.bf16.gmra.mrb[0].mxu0 %v1090
    %v1126 = vpop.f32.mrb[0].mxu0
    %v1127 = vadd.f32 0.0, %v1126
    %v1128 = vpop.f32.mrb[0].mxu0
    %v1129 = vpop.f32.mrb[0].mxu0
    %v1130 = vadd.f32 0.0, %v1129
    %v1131 = vpop.f32.mrb[0].mxu0
    %1132 = vdwg.mxu0
    %v1133 = vadd.f32 %v964, %v1127
    %v1134 = vadd.f32 %v965, %v1130
    %1135 = vst.msk [vmem:[#allocation2] sm:$0xff] %vm86, %v1133
    %1136 = vst.msk [vmem:[#allocation2 + $0x8] sm:$0xff] %vm86, %v1134
    // Predicated region
    $region22: #{rotary_cross_encoder_layer.1} parent=1 // pred_check
      _
    $region23: #{rotary_cross_encoder_layer.1} parent=1 // pred_check_branch
      %1138 = sbr.rel (0) target = $region25
    $region24: #{rotary_cross_encoder_layer.1} parent=1 // pred_region
      %s1140 = ssub.s32 256, 256
      %1141 = vsyncadd [#allocation3], %s1140
      %s1142 = sshll.u32 [#allocation2], 4
      %s1143 = int_to_ptr.vmem [resolvable:$true] %s1142
      %1148 = dma.vmem_to_hbm [thread:$0]  %s1143, 256, %s5, [#allocation3], 128, 128, 8
    $region25: #{rotary_cross_encoder_layer.1} parent=1 // pred_fallthru
      _
    // Predicated region
    $region26: #{rotary_cross_encoder_layer.1} parent=1 // pred_check
      _
    $region27: #{rotary_cross_encoder_layer.1} parent=1 // pred_check_branch
      %1150 = sbr.rel (0) target = $region29
    $region28: #{rotary_cross_encoder_layer.1} parent=1 // pred_region
      %1151 = dma.done [#allocation3], 256
    $region29: #{rotary_cross_encoder_layer.1} parent=1 // pred_fallthru
      _
    %1152 = vsyncpa [#allocation3], 1

</llo_original>
